<compile_context>
chip_gen: v7x
topology: tpu7x:2x2x1
jax: 0.10.0
libtpu: 0.0.40
codegen_flags: <defaults>
</compile_context>

<pallas_src>
import jax
import jax.numpy as jnp
from jax import lax
from jax.experimental import pallas as pl
from jax.experimental.pallas import tpu as pltpu

# ---------------- config (mirrors the PyTorch module's config) --------------
NUM_BATCHES = 4      # independent logical mini-batches processed per launch
BATCH = 8            # rows per mini-batch (BatchNorm statistics per mini-batch)
VOCAB = 256          # config.vocab_size
HIDDEN = 64          # config.en1_units
NUM_TOPIC = 16       # config.num_topic
COMMITMENT_COST = 0.25
BN_EPS = 1e-5
# activation = 'softplus', normalisation = 'batch_norm', init = 'xavier'


def _softplus(x):
    # numerically-stable softplus (VPU/EUP friendly)
    return jnp.maximum(x, 0.0) + jnp.log(1.0 + jnp.exp(-jnp.abs(x)))


def tsctm_kernel(bow_ref, w11_ref, b11_ref, w12_ref, b12_ref,
                 w21_ref, b21_ref, emb_ref, wd_ref,
                 theta_out_ref, loss_ref):
    f32 = jnp.float32
    bf16 = jnp.bfloat16

    bow = bow_ref[...]                                   # (B, V) f32
    B = bow.shape[0]
    inv_b = 1.0 / B
    ones_b = jnp.ones((1, B), f32)                       # MXU-based batch stats

    def batchnorm(x):
        # BatchNorm1d, training mode, weight=1 / bias=0 (module init state).
        # Batch mean/var via ones-row matmuls (MXU) instead of axis-0 XLU work.
        mu = jnp.dot(ones_b, x, preferred_element_type=f32) * inv_b   # (1, F)
        xc = x - mu
        var = jnp.dot(ones_b, xc * xc, preferred_element_type=f32) * inv_b
        return xc * lax.rsqrt(var + BN_EPS)

    # ------------------------------ encode -----------------------------
    e1 = _softplus(jnp.dot(bow.astype(bf16), w11_ref[...],
                           preferred_element_type=f32) + b11_ref[...])
    e1 = _softplus(jnp.dot(e1.astype(bf16), w12_ref[...],
                           preferred_element_type=f32) + b12_ref[...])
    z = jnp.dot(e1.astype(bf16), w21_ref[...],
                preferred_element_type=f32) + b21_ref[...]
    theta = batchnorm(z)                                 # mean_bn(fc21(e1))

    # softmax(theta) with approximate reciprocal (EUP slot)
    t = theta - jnp.max(theta, axis=1, keepdims=True)
    et = jnp.exp(t)
    softmax_theta = et * pl.reciprocal(
        jnp.sum(et, axis=1, keepdims=True), approx=True)  # (B, K)
    theta_out_ref[...] = softmax_theta

    # ----------------------- topic_dist_quant (VQ) ----------------------
    emb = emb_ref[...]                                   # (K_e, D) codebook, f32
    d_dim = emb.shape[1]
    q_sq = jnp.sum(softmax_theta * softmax_theta, axis=1, keepdims=True)  # (B,1)
    ones_d = jnp.ones((1, d_dim), f32)
    e_sq = lax.dot_general(ones_d, emb * emb,
                           (((1,), (1,)), ((), ())),
                           preferred_element_type=f32)   # (1, K_e)
    qe = lax.dot_general(softmax_theta, emb,
                         (((1,), (1,)), ((), ())),
                         preferred_element_type=f32)     # (B, K_e)
    dist = q_sq + e_sq - 2.0 * qe                        # (B, K_e)

    # argmin via min + first-match one-hot (all 2D, no 1D intermediates)
    min_d = jnp.min(dist, axis=1, keepdims=True)
    iota = lax.broadcasted_iota(jnp.int32, dist.shape, 1)
    idx = jnp.min(jnp.where(dist <= min_d, iota, dist.shape[1]),
                  axis=1, keepdims=True)                 # (B, 1)
    onehot = (iota == idx).astype(f32)                   # (B, K_e)
    quantized = jnp.dot(onehot, emb, preferred_element_type=f32)   # (B, K)

    # VQ loss value: q_latent + commitment * e_latent (straight-through
    # estimator only changes gradients, not the forward value).
    diff = quantized - softmax_theta
    vq_loss = (1.0 + COMMITMENT_COST) * jnp.mean(diff * diff, keepdims=True)

    # ------------------ decode + reconstruction loss --------------------
    d_logits = jnp.dot(quantized.astype(bf16), wd_ref[...],
                       preferred_element_type=f32)       # (B, V)
    x = batchnorm(d_logits)
    # fused log-softmax: log softmax(x) = x - logsumexp(x)
    m = jnp.max(x, axis=1, keepdims=True)
    lse = m + jnp.log(jnp.sum(jnp.exp(x - m), axis=1, keepdims=True))
    log_recon = x - lse                                  # (B, V)
    per_sample = jnp.sum(-bow * log_recon, axis=1, keepdims=True)   # (B, 1)
    recon_loss = jnp.mean(per_sample, axis=0, keepdims=True)        # (1, 1)

    loss_ref[...] = recon_loss + vq_loss


def _const_spec(shape):
    return pl.BlockSpec(shape, lambda i: (0,) * len(shape))


def tsctm_forward_batched(bows, params):
    """bows: (N, B, V) of N independent mini-batches. Returns per-mini-batch
    (softmax_theta (N,B,K), loss (N,), contrastive_loss (N,))."""
    n, b, v = bows.shape
    k = NUM_TOPIC

    args = (
        bows,
        params["w11"], params["b11"],
        params["w12"], params["b12"],
        params["w21"], params["b21"],
        params["emb"], params["wd"],
    )
    in_specs = [pl.BlockSpec((None, b, v), lambda i: (i, 0, 0))]
    in_specs += [_const_spec(a.shape) for a in args[1:]]

    out_shape = (
        jax.ShapeDtypeStruct((n, b, k), jnp.float32),    # softmax_theta
        jax.ShapeDtypeStruct((n, 1, 1), jnp.float32),    # loss per mini-batch
    )
    out_specs = (
        pl.BlockSpec((None, b, k), lambda i: (i, 0, 0)),
        pl.BlockSpec((None, 1, 1), lambda i: (i, 0, 0)),
    )

    theta, loss = pl.pallas_call(
        tsctm_kernel,
        out_shape=out_shape,
        grid=(n,),
        in_specs=in_specs,
        out_specs=out_specs,
        compiler_params=pltpu.CompilerParams(
            dimension_semantics=("parallel",)),
    )(*args)

    loss = loss[:, 0, 0]
    # TODO(synk): TSC contrastive loss is an external, undefined module in the
    # reference source; its value is reported as 0 (added host-side).
    closs = jnp.zeros_like(loss)
    return theta, loss + closs, closs


def tsctm_forward(bow, params):
    """Single-mini-batch forward matching TSCTM.forward_noaug signature."""
    theta, loss, closs = tsctm_forward_batched(bow[None], params)
    return theta[0], loss[0], closs[0]


def init_params(key):
    """Deterministic xavier-uniform init, weights stored as [in, out].
    Large matmul weights live in HBM as bf16 (half the DMA bytes, native MXU
    rate); biases / codebook stay f32."""
    def xavier(k, fan_in, fan_out):
        limit = (6.0 / (fan_in + fan_out)) ** 0.5
        return jax.random.uniform(k, (fan_in, fan_out), jnp.float32,
                                  -limit, limit)

    k = jax.random.split(key, 6)
    params = {
        "w11": xavier(k[0], VOCAB, HIDDEN).astype(jnp.bfloat16),
        "b11": jnp.zeros((1, HIDDEN), jnp.float32),
        "w12": xavier(k[1], HIDDEN, HIDDEN).astype(jnp.bfloat16),
        "b12": jnp.zeros((1, HIDDEN), jnp.float32),
        "w21": xavier(k[2], HIDDEN, NUM_TOPIC).astype(jnp.bfloat16),
        "b21": jnp.zeros((1, NUM_TOPIC), jnp.float32),
        # fcd1: Linear(num_topic, vocab, bias=False); store W.T as (K, V)
        "wd": xavier(k[3], VOCAB, NUM_TOPIC).T.astype(jnp.bfloat16),
        # TopicDistQuant codebook: (num_embeddings=K, embedding_dim=K),
        # standard VQ init uniform(-1/K, 1/K)
        "emb": jax.random.uniform(k[4], (NUM_TOPIC, NUM_TOPIC), jnp.float32,
                                  -1.0 / NUM_TOPIC, 1.0 / NUM_TOPIC),
    }
    return params


if __name__ == "__main__":
    key = jax.random.PRNGKey(0)
    pkey, dkey = jax.random.split(key)
    params = init_params(pkey)

    # synthetic bag-of-words counts (non-negative), N independent mini-batches
    bows = jnp.floor(
        jax.random.uniform(dkey, (NUM_BATCHES, BATCH, VOCAB)) * 3.0
    ).astype(jnp.float32)

    # batched path: one launch, weights VMEM-resident across the grid
    theta, loss, closs = tsctm_forward_batched(bows, params)
    jax.block_until_ready((theta, loss, closs))

    assert theta.shape == (NUM_BATCHES, BATCH, NUM_TOPIC)
    assert loss.shape == (NUM_BATCHES,)
    assert bool(jnp.all(jnp.isfinite(theta)))
    assert bool(jnp.all(jnp.isfinite(loss)))
    # row-stochastic check for the topic distributions
    row_sums = jnp.sum(theta, axis=-1)
    assert bool(jnp.all(jnp.abs(row_sums - 1.0) < 1e-2))

    # single-mini-batch convenience path (module-equivalent signature)
    t1, l1, c1 = tsctm_forward(bows[0], params)
    jax.block_until_ready((t1, l1, c1))
    assert t1.shape == (BATCH, NUM_TOPIC) and bool(jnp.isfinite(l1))

    print("KERNEL_OK")
</pallas_src>

<mosaic_0001>
module attributes {stable_mosaic.version = 11 : i64} {
  func.func @tsctm_kernel(%arg0: i32, %arg1: memref<1x8x256xf32, #tpu.memory_space<vmem>>, %arg2: memref<256x64xbf16, #tpu.memory_space<vmem>>, %arg3: memref<1x64xf32, #tpu.memory_space<vmem>>, %arg4: memref<64x64xbf16, #tpu.memory_space<vmem>>, %arg5: memref<1x64xf32, #tpu.memory_space<vmem>>, %arg6: memref<64x16xbf16, #tpu.memory_space<vmem>>, %arg7: memref<1x16xf32, #tpu.memory_space<vmem>>, %arg8: memref<16x16xf32, #tpu.memory_space<vmem>>, %arg9: memref<16x256xbf16, #tpu.memory_space<vmem>>, %arg10: memref<1x8x16xf32, #tpu.memory_space<vmem>>, %arg11: memref<1x1x1xf32, #tpu.memory_space<vmem>>) attributes {dimension_semantics = [#tpu.dimension_semantics<parallel>], iteration_bounds = array<i64: 4>, scalar_prefetch = 0 : i64, scratch_operands = 0 : i64, tpu.core_type = #tpu.core_type<tc>, window_params = [{transform_indices = @transform_0, window_bounds = array<i64: 1, 8, 256>}, {pipeline_mode = #tpu.pipeline_mode<synchronous>, transform_indices = @transform_1, window_bounds = array<i64: 256, 64>}, {pipeline_mode = #tpu.pipeline_mode<synchronous>, transform_indices = @transform_2, window_bounds = array<i64: 1, 64>}, {pipeline_mode = #tpu.pipeline_mode<synchronous>, transform_indices = @transform_3, window_bounds = array<i64: 64, 64>}, {pipeline_mode = #tpu.pipeline_mode<synchronous>, transform_indices = @transform_4, window_bounds = array<i64: 1, 64>}, {pipeline_mode = #tpu.pipeline_mode<synchronous>, transform_indices = @transform_5, window_bounds = array<i64: 64, 16>}, {pipeline_mode = #tpu.pipeline_mode<synchronous>, transform_indices = @transform_6, window_bounds = array<i64: 1, 16>}, {pipeline_mode = #tpu.pipeline_mode<synchronous>, transform_indices = @transform_7, window_bounds = array<i64: 16, 16>}, {pipeline_mode = #tpu.pipeline_mode<synchronous>, transform_indices = @transform_8, window_bounds = array<i64: 16, 256>}, {transform_indices = @transform_9, window_bounds = array<i64: 1, 8, 16>}, {transform_indices = @transform_10, window_bounds = array<i64: 1, 1, 1>}]} {
    %c0 = arith.constant 0 : index
    %c0_0 = arith.constant 0 : index
    %c0_1 = arith.constant 0 : index
    %0 = vector.load %arg1[%c0, %c0_0, %c0_1] : memref<1x8x256xf32, #tpu.memory_space<vmem>>, vector<1x8x256xf32>
    %1 = vector.shape_cast %0 : vector<1x8x256xf32> to vector<8x256xf32>
    %cst = arith.constant 1.000000e+00 : f32
    %2 = vector.broadcast %cst : f32 to vector<1x8xf32>
    %3 = arith.truncf %1 : vector<8x256xf32> to vector<8x256xbf16>
    %c0_2 = arith.constant 0 : index
    %c0_3 = arith.constant 0 : index
    %4 = vector.load %arg2[%c0_2, %c0_3] : memref<256x64xbf16, #tpu.memory_space<vmem>>, vector<256x64xbf16>
    %cst_4 = arith.constant dense<0.000000e+00> : vector<8x64xf32>
    %5 = tpu.matmul %3, %4, %cst_4 {dimension_numbers = #tpu.dot_dimension_numbers<[1], [0], [0], [1], [0, 0, 1, 1], [], []>} : vector<8x256xbf16>, vector<256x64xbf16>, vector<8x64xf32> -> vector<8x64xf32>
    %c0_5 = arith.constant 0 : index
    %c0_6 = arith.constant 0 : index
    %6 = vector.load %arg3[%c0_5, %c0_6] : memref<1x64xf32, #tpu.memory_space<vmem>>, vector<1x64xf32>
    %7 = vector.broadcast %6 : vector<1x64xf32> to vector<8x64xf32>
    %8 = arith.addf %5, %7 : vector<8x64xf32>
    %cst_7 = arith.constant 0.000000e+00 : f32
    %9 = vector.broadcast %cst_7 : f32 to vector<8x64xf32>
    %10 = arith.maximumf %8, %9 : vector<8x64xf32>
    %11 = math.absf %8 : vector<8x64xf32>
    %cst_8 = arith.constant 0.000000e+00 : f32
    %12 = vector.broadcast %cst_8 : f32 to vector<8x64xf32>
    %13 = arith.subf %12, %11 : vector<8x64xf32>
    %14 = math.exp %13 : vector<8x64xf32>
    %cst_9 = arith.constant 1.000000e+00 : f32
    %15 = vector.broadcast %cst_9 : f32 to vector<8x64xf32>
    %16 = arith.addf %15, %14 : vector<8x64xf32>
    %17 = math.log %16 : vector<8x64xf32>
    %18 = arith.addf %10, %17 : vector<8x64xf32>
    %19 = arith.truncf %18 : vector<8x64xf32> to vector<8x64xbf16>
    %c0_10 = arith.constant 0 : index
    %c0_11 = arith.constant 0 : index
    %20 = vector.load %arg4[%c0_10, %c0_11] : memref<64x64xbf16, #tpu.memory_space<vmem>>, vector<64x64xbf16>
    %cst_12 = arith.constant dense<0.000000e+00> : vector<8x64xf32>
    %21 = tpu.matmul %19, %20, %cst_12 {dimension_numbers = #tpu.dot_dimension_numbers<[1], [0], [0], [1], [0, 0, 1, 1], [], []>} : vector<8x64xbf16>, vector<64x64xbf16>, vector<8x64xf32> -> vector<8x64xf32>
    %c0_13 = arith.constant 0 : index
    %c0_14 = arith.constant 0 : index
    %22 = vector.load %arg5[%c0_13, %c0_14] : memref<1x64xf32, #tpu.memory_space<vmem>>, vector<1x64xf32>
    %23 = vector.broadcast %22 : vector<1x64xf32> to vector<8x64xf32>
    %24 = arith.addf %21, %23 : vector<8x64xf32>
    %cst_15 = arith.constant 0.000000e+00 : f32
    %25 = vector.broadcast %cst_15 : f32 to vector<8x64xf32>
    %26 = arith.maximumf %24, %25 : vector<8x64xf32>
    %27 = math.absf %24 : vector<8x64xf32>
    %cst_16 = arith.constant 0.000000e+00 : f32
    %28 = vector.broadcast %cst_16 : f32 to vector<8x64xf32>
    %29 = arith.subf %28, %27 : vector<8x64xf32>
    %30 = math.exp %29 : vector<8x64xf32>
    %cst_17 = arith.constant 1.000000e+00 : f32
    %31 = vector.broadcast %cst_17 : f32 to vector<8x64xf32>
    %32 = arith.addf %31, %30 : vector<8x64xf32>
    %33 = math.log %32 : vector<8x64xf32>
    %34 = arith.addf %26, %33 : vector<8x64xf32>
    %35 = arith.truncf %34 : vector<8x64xf32> to vector<8x64xbf16>
    %c0_18 = arith.constant 0 : index
    %c0_19 = arith.constant 0 : index
    %36 = vector.load %arg6[%c0_18, %c0_19] : memref<64x16xbf16, #tpu.memory_space<vmem>>, vector<64x16xbf16>
    %cst_20 = arith.constant dense<0.000000e+00> : vector<8x16xf32>
    %37 = tpu.matmul %35, %36, %cst_20 {dimension_numbers = #tpu.dot_dimension_numbers<[1], [0], [0], [1], [0, 0, 1, 1], [], []>} : vector<8x64xbf16>, vector<64x16xbf16>, vector<8x16xf32> -> vector<8x16xf32>
    %c0_21 = arith.constant 0 : index
    %c0_22 = arith.constant 0 : index
    %38 = vector.load %arg7[%c0_21, %c0_22] : memref<1x16xf32, #tpu.memory_space<vmem>>, vector<1x16xf32>
    %39 = vector.broadcast %38 : vector<1x16xf32> to vector<8x16xf32>
    %40 = arith.addf %37, %39 : vector<8x16xf32>
    %cst_23 = arith.constant dense<0.000000e+00> : vector<1x16xf32>
    %41 = tpu.matmul %2, %40, %cst_23 {dimension_numbers = #tpu.dot_dimension_numbers<[1], [0], [0], [1], [0, 0, 1, 1], [], []>} : vector<1x8xf32>, vector<8x16xf32>, vector<1x16xf32> -> vector<1x16xf32>
    %cst_24 = arith.constant 1.250000e-01 : f32
    %42 = vector.broadcast %cst_24 : f32 to vector<1x16xf32>
    %43 = arith.mulf %41, %42 : vector<1x16xf32>
    %44 = vector.broadcast %43 : vector<1x16xf32> to vector<8x16xf32>
    %45 = arith.subf %40, %44 : vector<8x16xf32>
    %46 = arith.mulf %45, %45 : vector<8x16xf32>
    %cst_25 = arith.constant dense<0.000000e+00> : vector<1x16xf32>
    %47 = tpu.matmul %2, %46, %cst_25 {dimension_numbers = #tpu.dot_dimension_numbers<[1], [0], [0], [1], [0, 0, 1, 1], [], []>} : vector<1x8xf32>, vector<8x16xf32>, vector<1x16xf32> -> vector<1x16xf32>
    %cst_26 = arith.constant 1.250000e-01 : f32
    %48 = vector.broadcast %cst_26 : f32 to vector<1x16xf32>
    %49 = arith.mulf %47, %48 : vector<1x16xf32>
    %cst_27 = arith.constant 9.99999974E-6 : f32
    %50 = vector.broadcast %cst_27 : f32 to vector<1x16xf32>
    %51 = arith.addf %49, %50 : vector<1x16xf32>
    %52 = math.rsqrt %51 : vector<1x16xf32>
    %53 = vector.broadcast %52 : vector<1x16xf32> to vector<8x16xf32>
    %54 = arith.mulf %45, %53 : vector<8x16xf32>
    %cst_28 = arith.constant dense<0xFF800000> : vector<8xf32>
    %55 = vector.multi_reduction <maximumf>, %54, %cst_28 [1] : vector<8x16xf32> to vector<8xf32>
    %56 = vector.shape_cast %55 : vector<8xf32> to vector<8x1xf32>
    %57 = vector.broadcast %56 : vector<8x1xf32> to vector<8x16xf32>
    %58 = arith.subf %54, %57 : vector<8x16xf32>
    %59 = math.exp %58 : vector<8x16xf32>
    %cst_29 = arith.constant dense<0.000000e+00> : vector<8xf32>
    %60 = vector.multi_reduction <add>, %59, %cst_29 [1] : vector<8x16xf32> to vector<8xf32>
    %61 = vector.shape_cast %60 : vector<8xf32> to vector<8x1xf32>
    %62 = tpu.reciprocal %61 {approx = true} : vector<8x1xf32> -> vector<8x1xf32>
    %63 = vector.broadcast %62 : vector<8x1xf32> to vector<8x16xf32>
    %64 = arith.mulf %59, %63 : vector<8x16xf32>
    %c0_30 = arith.constant 0 : index
    %c0_31 = arith.constant 0 : index
    %c0_32 = arith.constant 0 : index
    %65 = vector.load %arg10[%c0_30, %c0_31, %c0_32] : memref<1x8x16xf32, #tpu.memory_space<vmem>>, vector<1x8x16xf32>
    %66 = vector.shape_cast %65 : vector<1x8x16xf32> to vector<8x16xf32>
    %67 = vector.shape_cast %64 : vector<8x16xf32> to vector<1x8x16xf32>
    tpu.vector_store %arg10[%c0_30, %c0_31, %c0_32], %67 {strides = array<i32>} : memref<1x8x16xf32, #tpu.memory_space<vmem>>, vector<1x8x16xf32>,
    %c0_33 = arith.constant 0 : index
    %c0_34 = arith.constant 0 : index
    %68 = vector.load %arg8[%c0_33, %c0_34] : memref<16x16xf32, #tpu.memory_space<vmem>>, vector<16x16xf32>
    %69 = arith.mulf %64, %64 : vector<8x16xf32>
    %cst_35 = arith.constant dense<0.000000e+00> : vector<8xf32>
    %70 = vector.multi_reduction <add>, %69, %cst_35 [1] : vector<8x16xf32> to vector<8xf32>
    %71 = vector.shape_cast %70 : vector<8xf32> to vector<8x1xf32>
    %cst_36 = arith.constant 1.000000e+00 : f32
    %72 = vector.broadcast %cst_36 : f32 to vector<1x16xf32>
    %73 = arith.mulf %68, %68 : vector<16x16xf32>
    %cst_37 = arith.constant dense<0.000000e+00> : vector<1x16xf32>
    %74 = tpu.matmul %72, %73, %cst_37 {dimension_numbers = #tpu.dot_dimension_numbers<[1], [1], [0], [0], [0, 0, 1, 0], [], []>} : vector<1x16xf32>, vector<16x16xf32>, vector<1x16xf32> -> vector<1x16xf32>
    %cst_38 = arith.constant dense<0.000000e+00> : vector<8x16xf32>
    %75 = tpu.matmul %64, %68, %cst_38 {dimension_numbers = #tpu.dot_dimension_numbers<[1], [1], [0], [0], [0, 0, 1, 0], [], []>} : vector<8x16xf32>, vector<16x16xf32>, vector<8x16xf32> -> vector<8x16xf32>
    %76 = vector.broadcast %71 : vector<8x1xf32> to vector<8x16xf32>
    %77 = vector.broadcast %74 : vector<1x16xf32> to vector<8x16xf32>
    %78 = arith.addf %76, %77 : vector<8x16xf32>
    %cst_39 = arith.constant 2.000000e+00 : f32
    %79 = vector.broadcast %cst_39 : f32 to vector<8x16xf32>
    %80 = arith.mulf %79, %75 : vector<8x16xf32>
    %81 = arith.subf %78, %80 : vector<8x16xf32>
    %cst_40 = arith.constant dense<0x7F800000> : vector<8xf32>
    %82 = vector.multi_reduction <minimumf>, %81, %cst_40 [1] : vector<8x16xf32> to vector<8xf32>
    %83 = vector.shape_cast %82 : vector<8xf32> to vector<8x1xf32>
    %84 = tpu.iota {dimensions = array<i32: 1>} : vector<8x16xi32>
    %85 = vector.broadcast %83 : vector<8x1xf32> to vector<8x16xf32>
    %86 = arith.cmpf ole, %81, %85 : vector<8x16xf32>
    %c16_i32 = arith.constant 16 : i32
    %87 = vector.broadcast %c16_i32 : i32 to vector<8x16xi32>
    %88 = arith.select %86, %84, %87 : vector<8x16xi1>, vector<8x16xi32>
    %cst_41 = arith.constant dense<2147483647> : vector<8xi32>
    %89 = vector.multi_reduction <minsi>, %88, %cst_41 [1] : vector<8x16xi32> to vector<8xi32>
    %90 = vector.shape_cast %89 : vector<8xi32> to vector<8x1xi32>
    %91 = vector.broadcast %90 : vector<8x1xi32> to vector<8x16xi32>
    %92 = arith.cmpi eq, %84, %91 : vector<8x16xi32>
    %93 = arith.extui %92 : vector<8x16xi1> to vector<8x16xi32>
    %94 = arith.sitofp %93 : vector<8x16xi32> to vector<8x16xf32>
    %cst_42 = arith.constant dense<0.000000e+00> : vector<8x16xf32>
    %95 = tpu.matmul %94, %68, %cst_42 {dimension_numbers = #tpu.dot_dimension_numbers<[1], [0], [0], [1], [0, 0, 1, 1], [], []>} : vector<8x16xf32>, vector<16x16xf32>, vector<8x16xf32> -> vector<8x16xf32>
    %96 = arith.subf %95, %64 : vector<8x16xf32>
    %97 = arith.mulf %96, %96 : vector<8x16xf32>
    %98 = vector.shape_cast %97 : vector<8x16xf32> to vector<1x8x16xf32>
    %cst_43 = arith.constant dense<0.000000e+00> : vector<1xf32>
    %99 = vector.multi_reduction <add>, %98, %cst_43 [1, 2] : vector<1x8x16xf32> to vector<1xf32>
    %100 = vector.shape_cast %99 : vector<1xf32> to vector<1x1x1xf32>
    %101 = vector.extract %100[0, 0, 0] : f32 from vector<1x1x1xf32>
    %102 = vector.broadcast %101 : f32 to vector<1x1xf32>
    %cst_44 = arith.constant 1.280000e+02 : f32
    %103 = vector.broadcast %cst_44 : f32 to vector<1x1xf32>
    %104 = arith.divf %102, %103 : vector<1x1xf32>
    %cst_45 = arith.constant 1.250000e+00 : f32
    %105 = vector.broadcast %cst_45 : f32 to vector<1x1xf32>
    %106 = arith.mulf %105, %104 : vector<1x1xf32>
    %107 = arith.truncf %95 : vector<8x16xf32> to vector<8x16xbf16>
    %c0_46 = arith.constant 0 : index
    %c0_47 = arith.constant 0 : index
    %108 = vector.load %arg9[%c0_46, %c0_47] : memref<16x256xbf16, #tpu.memory_space<vmem>>, vector<16x256xbf16>
    %cst_48 = arith.constant dense<0.000000e+00> : vector<8x256xf32>
    %109 = tpu.matmul %107, %108, %cst_48 {dimension_numbers = #tpu.dot_dimension_numbers<[1], [0], [0], [1], [0, 0, 1, 1], [], []>} : vector<8x16xbf16>, vector<16x256xbf16>, vector<8x256xf32> -> vector<8x256xf32>
    %cst_49 = arith.constant dense<0.000000e+00> : vector<1x256xf32>
    %110 = tpu.matmul %2, %109, %cst_49 {dimension_numbers = #tpu.dot_dimension_numbers<[1], [0], [0], [1], [0, 0, 1, 1], [], []>} : vector<1x8xf32>, vector<8x256xf32>, vector<1x256xf32> -> vector<1x256xf32>
    %cst_50 = arith.constant 1.250000e-01 : f32
    %111 = vector.broadcast %cst_50 : f32 to vector<1x256xf32>
    %112 = arith.mulf %110, %111 : vector<1x256xf32>
    %113 = vector.broadcast %112 : vector<1x256xf32> to vector<8x256xf32>
    %114 = arith.subf %109, %113 : vector<8x256xf32>
    %115 = arith.mulf %114, %114 : vector<8x256xf32>
    %cst_51 = arith.constant dense<0.000000e+00> : vector<1x256xf32>
    %116 = tpu.matmul %2, %115, %cst_51 {dimension_numbers = #tpu.dot_dimension_numbers<[1], [0], [0], [1], [0, 0, 1, 1], [], []>} : vector<1x8xf32>, vector<8x256xf32>, vector<1x256xf32> -> vector<1x256xf32>
    %cst_52 = arith.constant 1.250000e-01 : f32
    %117 = vector.broadcast %cst_52 : f32 to vector<1x256xf32>
    %118 = arith.mulf %116, %117 : vector<1x256xf32>
    %cst_53 = arith.constant 9.99999974E-6 : f32
    %119 = vector.broadcast %cst_53 : f32 to vector<1x256xf32>
    %120 = arith.addf %118, %119 : vector<1x256xf32>
    %121 = math.rsqrt %120 : vector<1x256xf32>
    %122 = vector.broadcast %121 : vector<1x256xf32> to vector<8x256xf32>
    %123 = arith.mulf %114, %122 : vector<8x256xf32>
    %cst_54 = arith.constant dense<0xFF800000> : vector<8xf32>
    %124 = vector.multi_reduction <maximumf>, %123, %cst_54 [1] : vector<8x256xf32> to vector<8xf32>
    %125 = vector.shape_cast %124 : vector<8xf32> to vector<8x1xf32>
    %126 = vector.broadcast %125 : vector<8x1xf32> to vector<8x256xf32>
    %127 = arith.subf %123, %126 : vector<8x256xf32>
    %128 = math.exp %127 : vector<8x256xf32>
    %cst_55 = arith.constant dense<0.000000e+00> : vector<8xf32>
    %129 = vector.multi_reduction <add>, %128, %cst_55 [1] : vector<8x256xf32> to vector<8xf32>
    %130 = vector.shape_cast %129 : vector<8xf32> to vector<8x1xf32>
    %131 = math.log %130 : vector<8x1xf32>
    %132 = arith.addf %125, %131 : vector<8x1xf32>
    %133 = vector.broadcast %132 : vector<8x1xf32> to vector<8x256xf32>
    %134 = arith.subf %123, %133 : vector<8x256xf32>
    %cst_56 = arith.constant 0.000000e+00 : f32
    %135 = vector.broadcast %cst_56 : f32 to vector<8x256xf32>
    %136 = arith.subf %135, %1 : vector<8x256xf32>
    %137 = arith.mulf %136, %134 : vector<8x256xf32>
    %cst_57 = arith.constant dense<0.000000e+00> : vector<8xf32>
    %138 = vector.multi_reduction <add>, %137, %cst_57 [1] : vector<8x256xf32> to vector<8xf32>
    %139 = vector.shape_cast %138 : vector<8xf32> to vector<8x1xf32>
    %cst_58 = arith.constant dense<0.000000e+00> : vector<1xf32>
    %140 = vector.multi_reduction <add>, %139, %cst_58 [0] : vector<8x1xf32> to vector<1xf32>
    %141 = vector.shape_cast %140 : vector<1xf32> to vector<1x1xf32>
    %cst_59 = arith.constant 8.000000e+00 : f32
    %142 = vector.broadcast %cst_59 : f32 to vector<1x1xf32>
    %143 = arith.divf %141, %142 : vector<1x1xf32>
    %144 = arith.addf %143, %106 : vector<1x1xf32>
    %c0_60 = arith.constant 0 : index
    %c0_61 = arith.constant 0 : index
    %c0_62 = arith.constant 0 : index
    %145 = vector.load %arg11[%c0_60, %c0_61, %c0_62] : memref<1x1x1xf32, #tpu.memory_space<vmem>>, vector<1x1x1xf32>
    %146 = vector.shape_cast %145 : vector<1x1x1xf32> to vector<1x1xf32>
    %147 = vector.shape_cast %144 : vector<1x1xf32> to vector<1x1x1xf32>
    tpu.vector_store %arg11[%c0_60, %c0_61, %c0_62], %147 {strides = array<i32>} : memref<1x1x1xf32, #tpu.memory_space<vmem>>, vector<1x1x1xf32>,
    return
  }
  func.func @transform_0(%arg0: i32) -> (i32, i32, i32) {
    %c0_i32 = arith.constant 0 : i32
    %c0_i32_0 = arith.constant 0 : i32
    %c0_i32_1 = arith.constant 0 : i32
    return %arg0, %c0_i32, %c0_i32_0 : i32, i32, i32
  }
  func.func @transform_1(%arg0: i32) -> (i32, i32) {
    %c0_i32 = arith.constant 0 : i32
    %c0_i32_0 = arith.constant 0 : i32
    %c0_i32_1 = arith.constant 0 : i32
    return %c0_i32, %c0_i32_0 : i32, i32
  }
  func.func @transform_2(%arg0: i32) -> (i32, i32) {
    %c0_i32 = arith.constant 0 : i32
    %c0_i32_0 = arith.constant 0 : i32
    %c0_i32_1 = arith.constant 0 : i32
    return %c0_i32, %c0_i32_0 : i32, i32
  }
  func.func @transform_3(%arg0: i32) -> (i32, i32) {
    %c0_i32 = arith.constant 0 : i32
    %c0_i32_0 = arith.constant 0 : i32
    %c0_i32_1 = arith.constant 0 : i32
    return %c0_i32, %c0_i32_0 : i32, i32
  }
  func.func @transform_4(%arg0: i32) -> (i32, i32) {
    %c0_i32 = arith.constant 0 : i32
    %c0_i32_0 = arith.constant 0 : i32
    %c0_i32_1 = arith.constant 0 : i32
    return %c0_i32, %c0_i32_0 : i32, i32
  }
  func.func @transform_5(%arg0: i32) -> (i32, i32) {
    %c0_i32 = arith.constant 0 : i32
    %c0_i32_0 = arith.constant 0 : i32
    %c0_i32_1 = arith.constant 0 : i32
    return %c0_i32, %c0_i32_0 : i32, i32
  }
  func.func @transform_6(%arg0: i32) -> (i32, i32) {
    %c0_i32 = arith.constant 0 : i32
    %c0_i32_0 = arith.constant 0 : i32
    %c0_i32_1 = arith.constant 0 : i32
    return %c0_i32, %c0_i32_0 : i32, i32
  }
  func.func @transform_7(%arg0: i32) -> (i32, i32) {
    %c0_i32 = arith.constant 0 : i32
    %c0_i32_0 = arith.constant 0 : i32
    %c0_i32_1 = arith.constant 0 : i32
    return %c0_i32, %c0_i32_0 : i32, i32
  }
  func.func @transform_8(%arg0: i32) -> (i32, i32) {
    %c0_i32 = arith.constant 0 : i32
    %c0_i32_0 = arith.constant 0 : i32
    %c0_i32_1 = arith.constant 0 : i32
    return %c0_i32, %c0_i32_0 : i32, i32
  }
  func.func @transform_9(%arg0: i32) -> (i32, i32, i32) {
    %c0_i32 = arith.constant 0 : i32
    %c0_i32_0 = arith.constant 0 : i32
    %c0_i32_1 = arith.constant 0 : i32
    return %arg0, %c0_i32, %c0_i32_0 : i32, i32, i32
  }
  func.func @transform_10(%arg0: i32) -> (i32, i32, i32) {
    %c0_i32 = arith.constant 0 : i32
    %c0_i32_0 = arith.constant 0 : i32
    %c0_i32_1 = arith.constant 0 : i32
    return %arg0, %c0_i32, %c0_i32_0 : i32, i32, i32
  }
}

</mosaic_0001>

<llo_original>
// kernel: tpu_custom_call.1
$region0: #{tpu_custom_call.1}
  #allocation0 [shape = 'u32[]', space=smem, size = 0x4, offset = 0x4, fixed_abs, tag = 'smem constant byte address 0x4 - core index']
  #allocation1 [shape = 'u32[144,128]{1,0:T(1,128)}', space=vmem, size = 0x12000, scoped, tag = 'internal scratch']
  %s0 = inlined_call_operand.vmem [shape: f32[4,8,256], index: 0, kind: input, shape index: {}]
  %s1 = inlined_call_operand.vmem [shape: bf16[256,64], index: 1, kind: input, shape index: {}]
  %s2 = inlined_call_operand.vmem [shape: f32[1,64], index: 2, kind: input, shape index: {}]
  %s3 = inlined_call_operand.vmem [shape: bf16[64,64], index: 3, kind: input, shape index: {}]
  %s4 = inlined_call_operand.vmem [shape: f32[1,64], index: 4, kind: input, shape index: {}]
  %s5 = inlined_call_operand.vmem [shape: bf16[64,16], index: 5, kind: input, shape index: {}]
  %s6 = inlined_call_operand.vmem [shape: f32[1,16], index: 6, kind: input, shape index: {}]
  %s7 = inlined_call_operand.vmem [shape: f32[16,16], index: 7, kind: input, shape index: {}]
  %s8 = inlined_call_operand.vmem [shape: bf16[16,256], index: 8, kind: input, shape index: {}]
  %s9 = inlined_call_operand.hbm [shape: f32[4,8,16], index: 9, kind: output, shape index: {0}]
  %s10 = inlined_call_operand.vmem [shape: f32[4,1,1], index: 10, kind: output, shape index: {1}]
  %11 = xla_tuple %s9, %s10
  %s12 = sld [smem:[#allocation0]]
  $region77: #{tpu_custom_call.1} parent=0
    _
  %s14 = ssub.s32 1, %s12
  %s15 = scalar_select 0, %s14, %s12
  $region1: #{tpu_custom_call.1} parent=0
    #allocation2 [shape = 'u8[8192]{0}', space=vmem, size = 0x2000, scoped, tag = 'output window, operand 0']
    #allocation3 [shape = 's32[2]{0}', space=sflag, size = 0x8, scoped, tag = 'scoped memory for tpu_custom_call.1']
    %16 = vsyncpa [#allocation3], 0
    %s17 = scalar_lea.sflag [#allocation3], 1
    %18 = vsyncpa %s17, 0
    loop: start=0, step=1, limit=6
    $region2: #{tpu_custom_call.1} parent=1 // loop_pre_header
      _
    $region3: #{tpu_custom_call.1} parent=1 // loop_header
      %s20 = sphi 0, %s24
      %p21 = scmp.ge.s32.totalorder %s20, 6
      %s30 = sphi 0, %s32
      %s33 = sphi 0, %s30
      %s34 = sphi 0, %s33
      %s50 = sphi 0, %s34
      %s54 = sphi 0, %s54
      %s56 = sphi 0, %s54
      %s57 = sphi 0, %s56
      %s71 = sphi 0, %s57
      %s75 = sphi 0, %s75
      %s77 = sphi 0, %s75
      %s78 = sphi 0, %s77
      %s92 = sphi 0, %s78
      %s96 = sphi 0, %s96
      %s98 = sphi 0, %s96
      %s99 = sphi 0, %s98
      %s113 = sphi 0, %s99
      %s117 = sphi 0, %s117
      %s119 = sphi 0, %s117
      %s120 = sphi 0, %s119
      %s134 = sphi 0, %s120
      %s138 = sphi 0, %s138
      %s140 = sphi 0, %s138
      %s141 = sphi 0, %s140
      %s155 = sphi 0, %s141
      %s159 = sphi 0, %s159
      %s161 = sphi 0, %s159
      %s162 = sphi 0, %s161
      %s176 = sphi 0, %s162
      %s180 = sphi 0, %s180
      %s182 = sphi 0, %s180
      %s183 = sphi 0, %s182
      %s197 = sphi 0, %s183
      %s201 = sphi 0, %s201
      %s203 = sphi 0, %s201
      %s204 = sphi 0, %s203
      %s218 = sphi 0, %s204
      %s224 = sphi 0, %s226
      %s227 = sphi 0, %s224
      %s228 = sphi 0, %s227
      %s244 = sphi 0, %s228
      %s250 = sphi 0, %s252
      %s253 = sphi 0, %s250
      %s254 = sphi 0, %s253
      %s270 = sphi 0, %s254
    $region4: #{tpu_custom_call.1} parent=1 // loop_header_branch
      %23 = sbr.rel (%p21) target = $region8
    $region5: #{tpu_custom_call.1} parent=1 // loop_body
      %s25 = ssub.s32 %s20, 1
      %s26 = ssub.s32 %s20, 2
      %s27 = sadd.s32 %s20, 1
      %s28 = ssub.s32 %s20, %s27
      %p29 = scmp.eq.s32.totalorder %s28, 0
      %s31 = sadd.s32 %s30, 1
      %s32 = scalar_select %p29, %s30, %s31
      %p35 = pneg %p29
      %p36 = scmp.eq.s32.totalorder %s20, 3
      %p37 = por %p35, %p36
      %p38 = scmp.ne.s32.totalorder %s30, %s33
      %p39 = scmp.eq.s32.totalorder %s20, 0
      %p40 = por %p38, %p39
      %p41 = scmp.ne.s32.totalorder %s30, %s33
      %p42 = scmp.eq.s32.totalorder %s25, 3
      %p43 = por %p41, %p42
      %p44 = scmp.ne.s32.totalorder %s33, %s34
      %p45 = scmp.eq.s32.totalorder %s25, 0
      %p46 = por %p44, %p45
      %p47 = scmp.ne.s32.totalorder %s33, %s34
      %p48 = scmp.eq.s32.totalorder %s26, 3
      %p49 = por %p47, %p48
      %p51 = scmp.ne.s32.totalorder %s34, %s50
      %p52 = scmp.eq.s32.totalorder %s26, 0
      %p53 = por %p51, %p52
      %s55 = sadd.s32 %s54, 1
      %p58 = scmp.eq.s32.totalorder %s20, 3
      %p59 = scmp.ne.s32.totalorder %s54, %s56
      %p60 = scmp.eq.s32.totalorder %s20, 0
      %p61 = por %p59, %p60
      %p62 = scmp.ne.s32.totalorder %s54, %s56
      %p63 = scmp.eq.s32.totalorder %s25, 3
      %p64 = por %p62, %p63
      %p65 = scmp.ne.s32.totalorder %s56, %s57
      %p66 = scmp.eq.s32.totalorder %s25, 0
      %p67 = por %p65, %p66
      %p68 = scmp.ne.s32.totalorder %s56, %s57
      %p69 = scmp.eq.s32.totalorder %s26, 3
      %p70 = por %p68, %p69
      %p72 = scmp.ne.s32.totalorder %s57, %s71
      %p73 = scmp.eq.s32.totalorder %s26, 0
      %p74 = por %p72, %p73
      %s76 = sadd.s32 %s75, 1
      %p79 = scmp.eq.s32.totalorder %s20, 3
      %p80 = scmp.ne.s32.totalorder %s75, %s77
      %p81 = scmp.eq.s32.totalorder %s20, 0
      %p82 = por %p80, %p81
      %p83 = scmp.ne.s32.totalorder %s75, %s77
      %p84 = scmp.eq.s32.totalorder %s25, 3
      %p85 = por %p83, %p84
      %p86 = scmp.ne.s32.totalorder %s77, %s78
      %p87 = scmp.eq.s32.totalorder %s25, 0
      %p88 = por %p86, %p87
      %p89 = scmp.ne.s32.totalorder %s77, %s78
      %p90 = scmp.eq.s32.totalorder %s26, 3
      %p91 = por %p89, %p90
      %p93 = scmp.ne.s32.totalorder %s78, %s92
      %p94 = scmp.eq.s32.totalorder %s26, 0
      %p95 = por %p93, %p94
      %s97 = sadd.s32 %s96, 1
      %p100 = scmp.eq.s32.totalorder %s20, 3
      %p101 = scmp.ne.s32.totalorder %s96, %s98
      %p102 = scmp.eq.s32.totalorder %s20, 0
      %p103 = por %p101, %p102
      %p104 = scmp.ne.s32.totalorder %s96, %s98
      %p105 = scmp.eq.s32.totalorder %s25, 3
      %p106 = por %p104, %p105
      %p107 = scmp.ne.s32.totalorder %s98, %s99
      %p108 = scmp.eq.s32.totalorder %s25, 0
      %p109 = por %p107, %p108
      %p110 = scmp.ne.s32.totalorder %s98, %s99
      %p111 = scmp.eq.s32.totalorder %s26, 3
      %p112 = por %p110, %p111
      %p114 = scmp.ne.s32.totalorder %s99, %s113
      %p115 = scmp.eq.s32.totalorder %s26, 0
      %p116 = por %p114, %p115
      %s118 = sadd.s32 %s117, 1
      %p121 = scmp.eq.s32.totalorder %s20, 3
      %p122 = scmp.ne.s32.totalorder %s117, %s119
      %p123 = scmp.eq.s32.totalorder %s20, 0
      %p124 = por %p122, %p123
      %p125 = scmp.ne.s32.totalorder %s117, %s119
      %p126 = scmp.eq.s32.totalorder %s25, 3
      %p127 = por %p125, %p126
      %p128 = scmp.ne.s32.totalorder %s119, %s120
      %p129 = scmp.eq.s32.totalorder %s25, 0
      %p130 = por %p128, %p129
      %p131 = scmp.ne.s32.totalorder %s119, %s120
      %p132 = scmp.eq.s32.totalorder %s26, 3
      %p133 = por %p131, %p132
      %p135 = scmp.ne.s32.totalorder %s120, %s134
      %p136 = scmp.eq.s32.totalorder %s26, 0
      %p137 = por %p135, %p136
      %s139 = sadd.s32 %s138, 1
      %p142 = scmp.eq.s32.totalorder %s20, 3
      %p143 = scmp.ne.s32.totalorder %s138, %s140
      %p144 = scmp.eq.s32.totalorder %s20, 0
      %p145 = por %p143, %p144
      %p146 = scmp.ne.s32.totalorder %s138, %s140
      %p147 = scmp.eq.s32.totalorder %s25, 3
      %p148 = por %p146, %p147
      %p149 = scmp.ne.s32.totalorder %s140, %s141
      %p150 = scmp.eq.s32.totalorder %s25, 0
      %p151 = por %p149, %p150
      %p152 = scmp.ne.s32.totalorder %s140, %s141
      %p153 = scmp.eq.s32.totalorder %s26, 3
      %p154 = por %p152, %p153
      %p156 = scmp.ne.s32.totalorder %s141, %s155
      %p157 = scmp.eq.s32.totalorder %s26, 0
      %p158 = por %p156, %p157
      %s160 = sadd.s32 %s159, 1
      %p163 = scmp.eq.s32.totalorder %s20, 3
      %p164 = scmp.ne.s32.totalorder %s159, %s161
      %p165 = scmp.eq.s32.totalorder %s20, 0
      %p166 = por %p164, %p165
      %p167 = scmp.ne.s32.totalorder %s159, %s161
      %p168 = scmp.eq.s32.totalorder %s25, 3
      %p169 = por %p167, %p168
      %p170 = scmp.ne.s32.totalorder %s161, %s162
      %p171 = scmp.eq.s32.totalorder %s25, 0
      %p172 = por %p170, %p171
      %p173 = scmp.ne.s32.totalorder %s161, %s162
      %p174 = scmp.eq.s32.totalorder %s26, 3
      %p175 = por %p173, %p174
      %p177 = scmp.ne.s32.totalorder %s162, %s176
      %p178 = scmp.eq.s32.totalorder %s26, 0
      %p179 = por %p177, %p178
      %s181 = sadd.s32 %s180, 1
      %p184 = scmp.eq.s32.totalorder %s20, 3
      %p185 = scmp.ne.s32.totalorder %s180, %s182
      %p186 = scmp.eq.s32.totalorder %s20, 0
      %p187 = por %p185, %p186
      %p188 = scmp.ne.s32.totalorder %s180, %s182
      %p189 = scmp.eq.s32.totalorder %s25, 3
      %p190 = por %p188, %p189
      %p191 = scmp.ne.s32.totalorder %s182, %s183
      %p192 = scmp.eq.s32.totalorder %s25, 0
      %p193 = por %p191, %p192
      %p194 = scmp.ne.s32.totalorder %s182, %s183
      %p195 = scmp.eq.s32.totalorder %s26, 3
      %p196 = por %p194, %p195
      %p198 = scmp.ne.s32.totalorder %s183, %s197
      %p199 = scmp.eq.s32.totalorder %s26, 0
      %p200 = por %p198, %p199
      %s202 = sadd.s32 %s201, 1
      %p205 = scmp.eq.s32.totalorder %s20, 3
      %p206 = scmp.ne.s32.totalorder %s201, %s203
      %p207 = scmp.eq.s32.totalorder %s20, 0
      %p208 = por %p206, %p207
      %p209 = scmp.ne.s32.totalorder %s201, %s203
      %p210 = scmp.eq.s32.totalorder %s25, 3
      %p211 = por %p209, %p210
      %p212 = scmp.ne.s32.totalorder %s203, %s204
      %p213 = scmp.eq.s32.totalorder %s25, 0
      %p214 = por %p212, %p213
      %p215 = scmp.ne.s32.totalorder %s203, %s204
      %p216 = scmp.eq.s32.totalorder %s26, 3
      %p217 = por %p215, %p216
      %p219 = scmp.ne.s32.totalorder %s204, %s218
      %p220 = scmp.eq.s32.totalorder %s26, 0
      %p221 = por %p219, %p220
      %s222 = ssub.s32 %s20, %s27
      %p223 = scmp.eq.s32.totalorder %s222, 0
      %s225 = sadd.s32 %s224, 1
      %s226 = scalar_select %p223, %s224, %s225
      %p229 = pneg %p223
      %p230 = scmp.eq.s32.totalorder %s20, 3
      %p231 = por %p229, %p230
      %p232 = scmp.ne.s32.totalorder %s224, %s227
      %p233 = scmp.eq.s32.totalorder %s20, 0
      %p234 = por %p232, %p233
      %p235 = scmp.ne.s32.totalorder %s224, %s227
      %p236 = scmp.eq.s32.totalorder %s25, 3
      %p237 = por %p235, %p236
      %p238 = scmp.ne.s32.totalorder %s227, %s228
      %p239 = scmp.eq.s32.totalorder %s25, 0
      %p240 = por %p238, %p239
      %p241 = scmp.ne.s32.totalorder %s227, %s228
      %p242 = scmp.eq.s32.totalorder %s26, 3
      %p243 = por %p241, %p242
      %p245 = scmp.ne.s32.totalorder %s228, %s244
      %p246 = scmp.eq.s32.totalorder %s26, 0
      %p247 = por %p245, %p246
      %s248 = ssub.s32 %s20, %s27
      %p249 = scmp.eq.s32.totalorder %s248, 0
      %s251 = sadd.s32 %s250, 1
      %s252 = scalar_select %p249, %s250, %s251
      %p255 = pneg %p249
      %p256 = scmp.eq.s32.totalorder %s20, 3
      %p257 = por %p255, %p256
      %p258 = scmp.ne.s32.totalorder %s250, %s253
      %p259 = scmp.eq.s32.totalorder %s20, 0
      %p260 = por %p258, %p259
      %p261 = scmp.ne.s32.totalorder %s250, %s253
      %p262 = scmp.eq.s32.totalorder %s25, 3
      %p263 = por %p261, %p262
      %p264 = scmp.ne.s32.totalorder %s253, %s254
      %p265 = scmp.eq.s32.totalorder %s25, 0
      %p266 = por %p264, %p265
      %p267 = scmp.ne.s32.totalorder %s253, %s254
      %p268 = scmp.eq.s32.totalorder %s26, 3
      %p269 = por %p267, %p268
      %p271 = scmp.ne.s32.totalorder %s254, %s270
      %p272 = scmp.eq.s32.totalorder %s26, 0
      %p273 = por %p271, %p272
      %p274 = scmp.le.s32.totalorder 1, %s20
      %p275 = scmp.lt.s32.totalorder %s20, 5
      %p276 = pnand %p274, %p275
      %p277 = pneg %p276
      // Predicated region
      $region9: #{tpu_custom_call.1} parent=5 // pred_check
        _
      $region10: #{tpu_custom_call.1} parent=5 // pred_check_branch
        %279 = sbr.rel (%p276) target = $region12
      $region11: #{tpu_custom_call.1} parent=5 // pred_region
        %s280 = ssub.s32 %s20, 1
        // Predicated region
        $region13: #{tpu_custom_call.1} parent=11 // pred_check
          %p281 = pneg %p67
        $region14: #{tpu_custom_call.1} parent=11 // pred_check_branch
          %283 = sbr.rel (%p281) target = $region16
        $region15: #{tpu_custom_call.1} parent=11 // pred_region
          _
        $region16: #{tpu_custom_call.1} parent=11 // pred_fallthru
          _
        // Predicated region
        $region17: #{tpu_custom_call.1} parent=11 // pred_check
          %p284 = pneg %p88
        $region18: #{tpu_custom_call.1} parent=11 // pred_check_branch
          %286 = sbr.rel (%p284) target = $region20
        $region19: #{tpu_custom_call.1} parent=11 // pred_region
          _
        $region20: #{tpu_custom_call.1} parent=11 // pred_fallthru
          _
        // Predicated region
        $region21: #{tpu_custom_call.1} parent=11 // pred_check
          %p287 = pneg %p109
        $region22: #{tpu_custom_call.1} parent=11 // pred_check_branch
          %289 = sbr.rel (%p287) target = $region24
        $region23: #{tpu_custom_call.1} parent=11 // pred_region
          _
        $region24: #{tpu_custom_call.1} parent=11 // pred_fallthru
          _
        // Predicated region
        $region25: #{tpu_custom_call.1} parent=11 // pred_check
          %p290 = pneg %p130
        $region26: #{tpu_custom_call.1} parent=11 // pred_check_branch
          %292 = sbr.rel (%p290) target = $region28
        $region27: #{tpu_custom_call.1} parent=11 // pred_region
          _
        $region28: #{tpu_custom_call.1} parent=11 // pred_fallthru
          _
        // Predicated region
        $region29: #{tpu_custom_call.1} parent=11 // pred_check
          %p293 = pneg %p151
        $region30: #{tpu_custom_call.1} parent=11 // pred_check_branch
          %295 = sbr.rel (%p293) target = $region32
        $region31: #{tpu_custom_call.1} parent=11 // pred_region
          _
        $region32: #{tpu_custom_call.1} parent=11 // pred_fallthru
          _
        // Predicated region
        $region33: #{tpu_custom_call.1} parent=11 // pred_check
          %p296 = pneg %p172
        $region34: #{tpu_custom_call.1} parent=11 // pred_check_branch
          %298 = sbr.rel (%p296) target = $region36
        $region35: #{tpu_custom_call.1} parent=11 // pred_region
          _
        $region36: #{tpu_custom_call.1} parent=11 // pred_fallthru
          _
        // Predicated region
        $region37: #{tpu_custom_call.1} parent=11 // pred_check
          %p299 = pneg %p193
        $region38: #{tpu_custom_call.1} parent=11 // pred_check_branch
          %301 = sbr.rel (%p299) target = $region40
        $region39: #{tpu_custom_call.1} parent=11 // pred_region
          _
        $region40: #{tpu_custom_call.1} parent=11 // pred_fallthru
          _
        // Predicated region
        $region41: #{tpu_custom_call.1} parent=11 // pred_check
          %p302 = pneg %p214
        $region42: #{tpu_custom_call.1} parent=11 // pred_check_branch
          %304 = sbr.rel (%p302) target = $region44
        $region43: #{tpu_custom_call.1} parent=11 // pred_region
          _
        $region44: #{tpu_custom_call.1} parent=11 // pred_fallthru
          _
      $region12: #{tpu_custom_call.1} parent=5 // pred_fallthru
        _
      %p305 = scmp.lt.s32.totalorder %s20, 4
      // Predicated region
      $region45: #{tpu_custom_call.1} parent=5 // pred_check
        %p306 = pneg %p305
      $region46: #{tpu_custom_call.1} parent=5 // pred_check_branch
        %308 = sbr.rel (%p306) target = $region48
      $region47: #{tpu_custom_call.1} parent=5 // pred_region
        // Predicated region
        $region49: #{tpu_custom_call.1} parent=47 // pred_check
          %p309 = pneg %p40
        $region50: #{tpu_custom_call.1} parent=47 // pred_check_branch
          %311 = sbr.rel (%p309) target = $region52
        $region51: #{tpu_custom_call.1} parent=47 // pred_region
          %p312 = scmp.lt.s32.totalorder %s20, 3
          %s313 = scalar_select %p312, %s20, 3
          %s314 = smul.addr %s313, 2
          %s315 = smul.addr %s314, 8
          %s316 = scalar_lea.vmem %s0, %s315
        $region52: #{tpu_custom_call.1} parent=47 // pred_fallthru
          _
      $region48: #{tpu_custom_call.1} parent=5 // pred_fallthru
        _
      %p317 = scmp.le.s32.totalorder 1, %s20
      %p318 = scmp.lt.s32.totalorder %s20, 5
      %p319 = pnand %p317, %p318
      %p320 = pneg %p319
      // Predicated region
      $region53: #{tpu_custom_call.1} parent=5 // pred_check
        _
      $region54: #{tpu_custom_call.1} parent=5 // pred_check_branch
        %322 = sbr.rel (%p319) target = $region56
      $region55: #{tpu_custom_call.1} parent=5 // pred_region
        %s323 = ssub.s32 %s20, 1
        %p324 = scmp.lt.s32.totalorder %s25, 3
        %s325 = scalar_select %p324, %s25, 3
        %s326 = smul.addr %s325, 2
        %s327 = smul.addr %s326, 8
        %s328 = scalar_lea.vmem %s0, %s327
        %p329 = pneg %p46
        %p330 = pneg %p43
        %p331 = pneg %p67
        %p332 = pneg %p64
        %p333 = pneg %p88
        %p334 = pneg %p85
        %p335 = pneg %p109
        %p336 = pneg %p106
        %p337 = pneg %p130
        %p338 = pneg %p127
        %p339 = pneg %p151
        %p340 = pneg %p148
        %p341 = pneg %p172
        %p342 = pneg %p169
        %p343 = pneg %p193
        %p344 = pneg %p190
        %p345 = pneg %p214
        %p346 = pneg %p211
        %p347 = pneg %p240
        %p348 = pneg %p237
        %s349 = sand.u32 %s227, 1
        %s350 = scalar_lea.sflag [#allocation3], %s349
        %s351 = sand.u32 %s227, 1
        %s352 = smul.addr %s351, 8
        %s353 = scalar_lea.vmem [#allocation2], %s352
        %p354 = pneg %p266
        %p355 = pneg %p263
        %p356 = scmp.lt.s32.totalorder %s25, 3
        %s357 = scalar_select %p356, %s25, 3
        %s358 = scalar_lea.vmem %s10, %s357
        %p359 = scmp.lt.s32.totalorder %s25, 3
        %s360 = scalar_select %p359, %s25, 3
        %s361 = smul.addr %s360, 2
        %s362 = smul.addr %s361, 8
        %s363 = scalar_lea.vmem %s0, %s362
        %p364 = scmp.lt.s32.totalorder %s25, 3
        %s365 = scalar_select %p364, %s25, 3
        %s366 = scalar_lea.vmem %s10, %s365
        %v368 = vld [vmem:[%s363] sm:$0xff]
        %v369 = vld [vmem:[%s363 + $0x8] sm:$0xff]
        %v370 = vpack.c.bf16 %v368, %v368
        %v371 = vpack.c.bf16 %v369, %v369
        %v372 = vld [vmem:[%s1] sm:$0xf]
        %v373 = vld [vmem:[%s1 + $0x4] sm:$0xf]
        %v374 = vld [vmem:[%s1 + $0x8] sm:$0xf]
        %v375 = vld [vmem:[%s1 + $0xc] sm:$0xf]
        %v376 = vld [vmem:[%s1 + $0x10] sm:$0xf]
        %v377 = vld [vmem:[%s1 + $0x14] sm:$0xf]
        %v378 = vld [vmem:[%s1 + $0x18] sm:$0xf]
        %v379 = vld [vmem:[%s1 + $0x1c] sm:$0xf]
        %v380 = vld [vmem:[%s1 + $0x20] sm:$0xf]
        %v381 = vld [vmem:[%s1 + $0x24] sm:$0xf]
        %v382 = vld [vmem:[%s1 + $0x28] sm:$0xf]
        %v383 = vld [vmem:[%s1 + $0x2c] sm:$0xf]
        %v384 = vld [vmem:[%s1 + $0x30] sm:$0xf]
        %v385 = vld [vmem:[%s1 + $0x34] sm:$0xf]
        %v386 = vld [vmem:[%s1 + $0x38] sm:$0xf]
        %v387 = vld [vmem:[%s1 + $0x3c] sm:$0xf]
        %v388 = vld [vmem:[%s1 + $0x40] sm:$0xf]
        %v389 = vld [vmem:[%s1 + $0x44] sm:$0xf]
        %v390 = vld [vmem:[%s1 + $0x48] sm:$0xf]
        %v391 = vld [vmem:[%s1 + $0x4c] sm:$0xf]
        %v392 = vld [vmem:[%s1 + $0x50] sm:$0xf]
        %v393 = vld [vmem:[%s1 + $0x54] sm:$0xf]
        %v394 = vld [vmem:[%s1 + $0x58] sm:$0xf]
        %v395 = vld [vmem:[%s1 + $0x5c] sm:$0xf]
        %v396 = vld [vmem:[%s1 + $0x60] sm:$0xf]
        %v397 = vld [vmem:[%s1 + $0x64] sm:$0xf]
        %v398 = vld [vmem:[%s1 + $0x68] sm:$0xf]
        %v399 = vld [vmem:[%s1 + $0x6c] sm:$0xf]
        %v400 = vld [vmem:[%s1 + $0x70] sm:$0xf]
        %v401 = vld [vmem:[%s1 + $0x74] sm:$0xf]
        %v402 = vld [vmem:[%s1 + $0x78] sm:$0xf]
        %v403 = vld [vmem:[%s1 + $0x7c] sm:$0xf]
        %v404 = vld [vmem:[%s2] sm:$0x1]
        %v406 = vlaneseq
        %v407 = vshrl.u32 %v406, 7
        %v408 = vsub.s32 0, %v407
        %v409 = vrot.slane %v404, %v408
        %v443 = vunpack.c.l.b16 %v372
        %v444 = vunpack.c.l.b16 %v373
        %v445 = vunpack.c.l.b16 %v374
        %v446 = vunpack.c.l.b16 %v375
        %v447 = vunpack.c.l.b16 %v376
        %v448 = vunpack.c.l.b16 %v377
        %v449 = vunpack.c.l.b16 %v378
        %v450 = vunpack.c.l.b16 %v379
        %v451 = vunpack.c.l.b16 %v380
        %v452 = vunpack.c.l.b16 %v381
        %v453 = vunpack.c.l.b16 %v382
        %v454 = vunpack.c.l.b16 %v383
        %v455 = vunpack.c.l.b16 %v384
        %v456 = vunpack.c.l.b16 %v385
        %v457 = vunpack.c.l.b16 %v386
        %v458 = vunpack.c.l.b16 %v387
        %v459 = vunpack.c.l.b16 %v388
        %v460 = vunpack.c.l.b16 %v389
        %v461 = vunpack.c.l.b16 %v390
        %v462 = vunpack.c.l.b16 %v391
        %v463 = vunpack.c.l.b16 %v392
        %v464 = vunpack.c.l.b16 %v393
        %v465 = vunpack.c.l.b16 %v394
        %v466 = vunpack.c.l.b16 %v395
        %v467 = vunpack.c.l.b16 %v396
        %v468 = vunpack.c.l.b16 %v397
        %v469 = vunpack.c.l.b16 %v398
        %v470 = vunpack.c.l.b16 %v399
        %v471 = vunpack.c.l.b16 %v400
        %v472 = vunpack.c.l.b16 %v401
        %v473 = vunpack.c.l.b16 %v402
        %v474 = vunpack.c.l.b16 %v403
        %v475 = vpack.c.b16 %v444, %v443
        %v476 = vpack.c.b16 %v446, %v445
        %v477 = vpack.c.b16 %v448, %v447
        %v478 = vpack.c.b16 %v450, %v449
        %v479 = vpack.c.b16 %v452, %v451
        %v480 = vpack.c.b16 %v454, %v453
        %v481 = vpack.c.b16 %v456, %v455
        %v482 = vpack.c.b16 %v458, %v457
        %v483 = vpack.c.b16 %v460, %v459
        %v484 = vpack.c.b16 %v462, %v461
        %v485 = vpack.c.b16 %v464, %v463
        %v486 = vpack.c.b16 %v466, %v465
        %v487 = vpack.c.b16 %v468, %v467
        %v488 = vpack.c.b16 %v470, %v469
        %v489 = vpack.c.b16 %v472, %v471
        %v490 = vpack.c.b16 %v474, %v473
        %507 = vmatprep.subr.bf16.mxu0 0
        %508 = vmatpush1.bf16.msra.mxu0 %v475
        %509 = vmatprep.subr.bf16.mxu0 0
        %510 = vmatpush1.bf16.msra.mxu0 %v476
        %511 = vmatprep.subr.bf16.mxu0 0
        %512 = vmatpush1.bf16.msra.mxu0 %v477
        %513 = vmatprep.subr.bf16.mxu0 0
        %514 = vmatpush1.bf16.msra.mxu0 %v478
        %515 = vmatprep.subr.bf16.mxu0 0
        %516 = vmatpush1.bf16.msra.mxu0 %v479
        %517 = vmatprep.subr.bf16.mxu0 0
        %518 = vmatpush1.bf16.msra.mxu0 %v480
        %519 = vmatprep.subr.bf16.mxu0 0
        %520 = vmatpush1.bf16.msra.mxu0 %v481
        %521 = vmatprep.subr.bf16.mxu0 0
        %522 = vmatpush1.bf16.msra.mxu0 %v482
        %523 = vmatprep.subr.bf16.mxu0 0
        %524 = vmatpush1.bf16.msra.mxu0 %v483
        %525 = vmatprep.subr.bf16.mxu0 0
        %526 = vmatpush1.bf16.msra.mxu0 %v484
        %527 = vmatprep.subr.bf16.mxu0 0
        %528 = vmatpush1.bf16.msra.mxu0 %v485
        %529 = vmatprep.subr.bf16.mxu0 0
        %530 = vmatpush1.bf16.msra.mxu0 %v486
        %531 = vmatprep.subr.bf16.mxu0 0
        %532 = vmatpush1.bf16.msra.mxu0 %v487
        %533 = vmatprep.subr.bf16.mxu0 0
        %534 = vmatpush1.bf16.msra.mxu0 %v488
        %535 = vmatprep.subr.bf16.mxu0 0
        %536 = vmatpush1.bf16.msra.mxu0 %v489
        %537 = vmatprep.subr.bf16.mxu0 0
        %538 = vmatpush1.bf16.msra.mxu0 %v490
        %539 = vmatprep.mubr.bf16.mxu0 %v371
        %540 = vmatmul.mubr.bf16.gmra.mrb[0].mxu0 %v370
        %v541 = vpop.f32.mrb[0].mxu0
        %v542 = vadd.f32 %v409, %v541
        %v543 = vpop.f32.mrb[0].mxu0
        %v544 = vpop.f32.mrb[0].mxu0
        %v545 = vpop.f32.mrb[0].mxu0
        %546 = vdwg.mxu0
        %v547 = vmax.f32 %v542, 0.0
        %v548 = vand.u32 2147483647, %v542
        %v549 = vsub.f32 0.0, %v548
        %v550 = vmul.f32 %v549, 1.442695
        %v551 = vpow.pop %v550
        %v552 = vadd.f32 %v551, 1.0
        %v553 = vlog2.pop %v552
        %v554 = vmul.f32 %v553, 0.6931472
        %v555 = vadd.f32 %v547, %v554
        %v556 = vpack.c.bf16 %v555, %v555
        %v557 = vld [vmem:[%s3] sm:$0xf]
        %v558 = vld [vmem:[%s3 + $0x4] sm:$0xf]
        %v559 = vld [vmem:[%s3 + $0x8] sm:$0xf]
        %v560 = vld [vmem:[%s3 + $0xc] sm:$0xf]
        %v561 = vld [vmem:[%s3 + $0x10] sm:$0xf]
        %v562 = vld [vmem:[%s3 + $0x14] sm:$0xf]
        %v563 = vld [vmem:[%s3 + $0x18] sm:$0xf]
        %v564 = vld [vmem:[%s3 + $0x1c] sm:$0xf]
        %v565 = vld [vmem:[%s4] sm:$0x1]
        %v567 = vlaneseq
        %v568 = vshrl.u32 %v567, 7
        %v569 = vsub.s32 0, %v568
        %v570 = vrot.slane %v565, %v569
        %v580 = vunpack.c.l.b16 %v557
        %v581 = vunpack.c.l.b16 %v558
        %v582 = vunpack.c.l.b16 %v559
        %v583 = vunpack.c.l.b16 %v560
        %v584 = vunpack.c.l.b16 %v561
        %v585 = vunpack.c.l.b16 %v562
        %v586 = vunpack.c.l.b16 %v563
        %v587 = vunpack.c.l.b16 %v564
        %v588 = vpack.c.b16 %v581, %v580
        %v589 = vpack.c.b16 %v583, %v582
        %v590 = vpack.c.b16 %v585, %v584
        %v591 = vpack.c.b16 %v587, %v586
        %vm596 = vcmask 523264
        %v598 = vsel %vm596, %v556, 0
        %600 = vmatprep.subr.bf16.mxu0 0
        %601 = vmatpush1.bf16.msra.mxu0 %v588
        %602 = vmatprep.subr.bf16.mxu0 0
        %603 = vmatpush1.bf16.msra.mxu0 %v589
        %604 = vmatprep.subr.bf16.mxu0 0
        %605 = vmatpush1.bf16.msra.mxu0 %v590
        %606 = vmatprep.subr.bf16.mxu0 0
        %607 = vmatpush1.bf16.msra.mxu0 %v591
        %608 = vmatprep.subr.bf16.mxu0 0
        %609 = vmatpush1.bf16.msra.mxu0 0
        %610 = vmatprep.subr.bf16.mxu0 0
        %611 = vmatpush1.bf16.msra.mxu0 0
        %612 = vmatprep.subr.bf16.mxu0 0
        %613 = vmatpush1.bf16.msra.mxu0 0
        %614 = vmatprep.subr.bf16.mxu0 0
        %615 = vmatpush1.bf16.msra.mxu0 0
        %616 = vmatprep.subr.bf16.mxu0 0
        %617 = vmatpush1.bf16.msra.mxu0 0
        %618 = vmatprep.subr.bf16.mxu0 0
        %619 = vmatpush1.bf16.msra.mxu0 0
        %620 = vmatprep.subr.bf16.mxu0 0
        %621 = vmatpush1.bf16.msra.mxu0 0
        %622 = vmatprep.subr.bf16.mxu0 0
        %623 = vmatpush1.bf16.msra.mxu0 0
        %624 = vmatprep.subr.bf16.mxu0 0
        %625 = vmatpush1.bf16.msra.mxu0 0
        %626 = vmatprep.subr.bf16.mxu0 0
        %627 = vmatpush1.bf16.msra.mxu0 0
        %628 = vmatprep.subr.bf16.mxu0 0
        %629 = vmatpush1.bf16.msra.mxu0 0
        %630 = vmatprep.subr.bf16.mxu0 0
        %631 = vmatpush1.bf16.msra.mxu0 0
        %632 = vmatprep.mubr.bf16.mxu0 0
        %633 = vmatmul.mubr.bf16.gmra.mrb[0].mxu0 %v598
        %v634 = vpop.f32.mrb[0].mxu0
        %v635 = vadd.f32 %v570, %v634
        %v636 = vpop.f32.mrb[0].mxu0
        %v637 = vpop.f32.mrb[0].mxu0
        %v638 = vpop.f32.mrb[0].mxu0
        %639 = vdwg.mxu0
        %v640 = vmax.f32 %v635, 0.0
        %v641 = vand.u32 2147483647, %v635
        %v642 = vsub.f32 0.0, %v641
        %v643 = vmul.f32 %v642, 1.442695
        %v644 = vpow.pop %v643
        %v645 = vadd.f32 %v644, 1.0
        %v646 = vlog2.pop %v645
        %v647 = vmul.f32 %v646, 0.6931472
        %v648 = vadd.f32 %v640, %v647
        %v649 = vpack.c.bf16 %v648, %v648
        %v650 = vld [vmem:[%s5] sm:$0xf]
        %v651 = vld [vmem:[%s5 + $0x4] sm:$0xf]
        %v652 = vld [vmem:[%s5 + $0x8] sm:$0xf]
        %v653 = vld [vmem:[%s5 + $0xc] sm:$0xf]
        %v654 = vld [vmem:[%s5 + $0x10] sm:$0xf]
        %v655 = vld [vmem:[%s5 + $0x14] sm:$0xf]
        %v656 = vld [vmem:[%s5 + $0x18] sm:$0xf]
        %v657 = vld [vmem:[%s5 + $0x1c] sm:$0xf]
        %v658 = vld [vmem:[%s6] sm:$0x1]
        %v660 = vlaneseq
        %v661 = vshrl.u32 %v660, 7
        %v662 = vsub.s32 0, %v661
        %v663 = vrot.slane %v658, %v662
        %v673 = vunpack.c.l.b16 %v650
        %v674 = vunpack.c.l.b16 %v651
        %v675 = vunpack.c.l.b16 %v652
        %v676 = vunpack.c.l.b16 %v653
        %v677 = vunpack.c.l.b16 %v654
        %v678 = vunpack.c.l.b16 %v655
        %v679 = vunpack.c.l.b16 %v656
        %v680 = vunpack.c.l.b16 %v657
        %v681 = vpack.c.b16 %v674, %v673
        %v682 = vpack.c.b16 %v676, %v675
        %v683 = vpack.c.b16 %v678, %v677
        %v684 = vpack.c.b16 %v680, %v679
        %v690 = vsel %vm596, %v649, 0
        %692 = vmatprep.subr.bf16.mxu0 0
        %693 = vmatpush1.bf16.msra.mxu0 %v681
        %694 = vmatprep.subr.bf16.mxu0 0
        %695 = vmatpush1.bf16.msra.mxu0 %v682
        %696 = vmatprep.subr.bf16.mxu0 0
        %697 = vmatpush1.bf16.msra.mxu0 %v683
        %698 = vmatprep.subr.bf16.mxu0 0
        %699 = vmatpush1.bf16.msra.mxu0 %v684
        %700 = vmatprep.subr.bf16.mxu0 0
        %701 = vmatpush1.bf16.msra.mxu0 0
        %702 = vmatprep.subr.bf16.mxu0 0
        %703 = vmatpush1.bf16.msra.mxu0 0
        %704 = vmatprep.subr.bf16.mxu0 0
        %705 = vmatpush1.bf16.msra.mxu0 0
        %706 = vmatprep.subr.bf16.mxu0 0
        %707 = vmatpush1.bf16.msra.mxu0 0
        %708 = vmatprep.subr.bf16.mxu0 0
        %709 = vmatpush1.bf16.msra.mxu0 0
        %710 = vmatprep.subr.bf16.mxu0 0
        %711 = vmatpush1.bf16.msra.mxu0 0
        %712 = vmatprep.subr.bf16.mxu0 0
        %713 = vmatpush1.bf16.msra.mxu0 0
        %714 = vmatprep.subr.bf16.mxu0 0
        %715 = vmatpush1.bf16.msra.mxu0 0
        %716 = vmatprep.subr.bf16.mxu0 0
        %717 = vmatpush1.bf16.msra.mxu0 0
        %718 = vmatprep.subr.bf16.mxu0 0
        %719 = vmatpush1.bf16.msra.mxu0 0
        %720 = vmatprep.subr.bf16.mxu0 0
        %721 = vmatpush1.bf16.msra.mxu0 0
        %722 = vmatprep.subr.bf16.mxu0 0
        %723 = vmatpush1.bf16.msra.mxu0 0
        %724 = vmatprep.mubr.bf16.mxu0 0
        %725 = vmatmul.mubr.bf16.gmra.mrb[0].mxu0 %v690
        %v726 = vpop.f32.mrb[0].mxu0
        %v727 = vadd.f32 %v663, %v726
        %v728 = vpop.f32.mrb[0].mxu0
        %v729 = vpop.f32.mrb[0].mxu0
        %v730 = vpop.f32.mrb[0].mxu0
        %731 = vdwg.mxu0
        %vm732 = vcmask 64512
        %v734 = vsel %vm732, 1.0, 0
        %736 = vmatprep.subr.mxu0 0.0
        %737 = vmatpush1.msra.mxu0 %v727
        %738 = vmatprep.subr.mxu0 0.0
        %739 = vmatpush1.msra.mxu0 0.0
        %740 = vmatprep.subr.mxu0 0.0
        %741 = vmatpush1.msra.mxu0 0.0
        %742 = vmatprep.subr.mxu0 0.0
        %743 = vmatpush1.msra.mxu0 0.0
        %744 = vmatprep.subr.mxu0 0.0
        %745 = vmatpush1.msra.mxu0 0.0
        %746 = vmatprep.subr.mxu0 0.0
        %747 = vmatpush1.msra.mxu0 0.0
        %748 = vmatprep.subr.mxu0 0.0
        %749 = vmatpush1.msra.mxu0 0.0
        %750 = vmatprep.subr.mxu0 0.0
        %751 = vmatpush1.msra.mxu0 0.0
        %752 = vmatprep.subr.mxu0 0.0
        %753 = vmatpush1.msra.mxu0 0.0
        %754 = vmatprep.subr.mxu0 0.0
        %755 = vmatpush1.msra.mxu0 0.0
        %756 = vmatprep.subr.mxu0 0.0
        %757 = vmatpush1.msra.mxu0 0.0
        %758 = vmatprep.subr.mxu0 0.0
        %759 = vmatpush1.msra.mxu0 0.0
        %760 = vmatprep.subr.mxu0 0.0
        %761 = vmatpush1.msra.mxu0 0.0
        %762 = vmatprep.subr.mxu0 0.0
        %763 = vmatpush1.msra.mxu0 0.0
        %764 = vmatprep.subr.mxu0 0.0
        %765 = vmatpush1.msra.mxu0 0.0
        %766 = vmatprep.subr.mxu0 0.0
        %767 = vmatpush1.msra.mxu0 0.0
        %768 = vmatprep.subr.mxu0 0.0
        %769 = vmatpush1.msra.mxu0 0.0
        %770 = vmatprep.subr.mxu0 0.0
        %771 = vmatpush1.msra.mxu0 0.0
        %772 = vmatprep.subr.mxu0 0.0
        %773 = vmatpush1.msra.mxu0 0.0
        %774 = vmatprep.subr.mxu0 0.0
        %775 = vmatpush1.msra.mxu0 0.0
        %776 = vmatprep.subr.mxu0 0.0
        %777 = vmatpush1.msra.mxu0 0.0
        %778 = vmatprep.subr.mxu0 0.0
        %779 = vmatpush1.msra.mxu0 0.0
        %780 = vmatprep.subr.mxu0 0.0
        %781 = vmatpush1.msra.mxu0 0.0
        %782 = vmatprep.subr.mxu0 0.0
        %783 = vmatpush1.msra.mxu0 0.0
        %784 = vmatprep.subr.mxu0 0.0
        %785 = vmatpush1.msra.mxu0 0.0
        %786 = vmatprep.subr.mxu0 0.0
        %787 = vmatpush1.msra.mxu0 0.0
        %788 = vmatprep.subr.mxu0 0.0
        %789 = vmatpush1.msra.mxu0 0.0
        %790 = vmatprep.subr.mxu0 0.0
        %791 = vmatpush1.msra.mxu0 0.0
        %792 = vmatprep.subr.mxu0 0.0
        %793 = vmatpush1.msra.mxu0 0.0
        %794 = vmatprep.subr.mxu0 0.0
        %795 = vmatpush1.msra.mxu0 0.0
        %796 = vmatprep.subr.mxu0 0.0
        %797 = vmatpush1.msra.mxu0 0.0
        %798 = vmatprep.subr.mxu0 0.0
        %799 = vmatpush1.msra.mxu0 0.0
        %800 = vmatprep.mubr.f32.mxu0 0.0
        %801 = vmatmul.mubr.f32.gmra.mrb[0].mxu0 %v734
        %v802 = vpop.f32.mrb[0].mxu0
        %v803 = vadd.f32 0.0, %v802
        %v804 = vpop.f32.mrb[0].mxu0
        %805 = vdwg.mxu0
        %v806 = vmul.f32 %v803, 0.125
        %v807 = vlaneseq
        %v808 = vshrl.u32 %v807, 7
        %v809 = vsub.s32 0, %v808
        %v810 = vrot.slane %v806, %v809
        %v811 = vsub.f32 %v727, %v810
        %v812 = vmul.f32 %v811, %v811
        %813 = vmatprep.subr.mxu0 0.0
        %814 = vmatpush1.msra.mxu0 %v812
        %815 = vmatprep.subr.mxu0 0.0
        %816 = vmatpush1.msra.mxu0 0.0
        %817 = vmatprep.subr.mxu0 0.0
        %818 = vmatpush1.msra.mxu0 0.0
        %819 = vmatprep.subr.mxu0 0.0
        %820 = vmatpush1.msra.mxu0 0.0
        %821 = vmatprep.subr.mxu0 0.0
        %822 = vmatpush1.msra.mxu0 0.0
        %823 = vmatprep.subr.mxu0 0.0
        %824 = vmatpush1.msra.mxu0 0.0
        %825 = vmatprep.subr.mxu0 0.0
        %826 = vmatpush1.msra.mxu0 0.0
        %827 = vmatprep.subr.mxu0 0.0
        %828 = vmatpush1.msra.mxu0 0.0
        %829 = vmatprep.subr.mxu0 0.0
        %830 = vmatpush1.msra.mxu0 0.0
        %831 = vmatprep.subr.mxu0 0.0
        %832 = vmatpush1.msra.mxu0 0.0
        %833 = vmatprep.subr.mxu0 0.0
        %834 = vmatpush1.msra.mxu0 0.0
        %835 = vmatprep.subr.mxu0 0.0
        %836 = vmatpush1.msra.mxu0 0.0
        %837 = vmatprep.subr.mxu0 0.0
        %838 = vmatpush1.msra.mxu0 0.0
        %839 = vmatprep.subr.mxu0 0.0
        %840 = vmatpush1.msra.mxu0 0.0
        %841 = vmatprep.subr.mxu0 0.0
        %842 = vmatpush1.msra.mxu0 0.0
        %843 = vmatprep.subr.mxu0 0.0
        %844 = vmatpush1.msra.mxu0 0.0
        %845 = vmatprep.subr.mxu0 0.0
        %846 = vmatpush1.msra.mxu0 0.0
        %847 = vmatprep.subr.mxu0 0.0
        %848 = vmatpush1.msra.mxu0 0.0
        %849 = vmatprep.subr.mxu0 0.0
        %850 = vmatpush1.msra.mxu0 0.0
        %851 = vmatprep.subr.mxu0 0.0
        %852 = vmatpush1.msra.mxu0 0.0
        %853 = vmatprep.subr.mxu0 0.0
        %854 = vmatpush1.msra.mxu0 0.0
        %855 = vmatprep.subr.mxu0 0.0
        %856 = vmatpush1.msra.mxu0 0.0
        %857 = vmatprep.subr.mxu0 0.0
        %858 = vmatpush1.msra.mxu0 0.0
        %859 = vmatprep.subr.mxu0 0.0
        %860 = vmatpush1.msra.mxu0 0.0
        %861 = vmatprep.subr.mxu0 0.0
        %862 = vmatpush1.msra.mxu0 0.0
        %863 = vmatprep.subr.mxu0 0.0
        %864 = vmatpush1.msra.mxu0 0.0
        %865 = vmatprep.subr.mxu0 0.0
        %866 = vmatpush1.msra.mxu0 0.0
        %867 = vmatprep.subr.mxu0 0.0
        %868 = vmatpush1.msra.mxu0 0.0
        %869 = vmatprep.subr.mxu0 0.0
        %870 = vmatpush1.msra.mxu0 0.0
        %871 = vmatprep.subr.mxu0 0.0
        %872 = vmatpush1.msra.mxu0 0.0
        %873 = vmatprep.subr.mxu0 0.0
        %874 = vmatpush1.msra.mxu0 0.0
        %875 = vmatprep.subr.mxu0 0.0
        %876 = vmatpush1.msra.mxu0 0.0
        %877 = vmatprep.mubr.f32.mxu0 0.0
        %878 = vmatmul.mubr.f32.gmra.mrb[0].mxu0 %v734
        %v879 = vpop.f32.mrb[0].mxu0
        %v880 = vadd.f32 0.0, %v879
        %v881 = vpop.f32.mrb[0].mxu0
        %882 = vdwg.mxu0
        %v883 = vmul.f32 %v880, 0.125
        %v884 = vadd.f32 %v883, 1e-05
        %v885 = vrsqrt.pop %v884
        %v886 = vlaneseq
        %v887 = vshrl.u32 %v886, 7
        %v888 = vsub.s32 0, %v887
        %v889 = vrot.slane %v885, %v888
        %v890 = vmul.f32 %v811, %v889
        %vm891 = vcmask 130048
        %v892 = vsel %vm891, %v890, -inf
        %893 = vmax.xlane.f32.xlu0 %v892
        %v894 = vpop.xlane.xlu0 %893
        %v895 = vsub.f32 %v890, %v894
        %v896 = vmul.f32 %v895, 1.442695
        %v897 = vpow.pop %v896
        %v898 = vsel %vm891, %v897, 0.0
        %899 = vadd.xlane.f32.xlu0 %v898
        %v900 = vpop.xlane.xlu0 %899
        %v901 = vrcp.pop %v900
        %v902 = vmul.f32 %v897, %v901
        %903 = vst.msk [vmem:[%s353] sm:$0xff] %vm891, %v902
        %v904 = vld [vmem:[%s7] sm:$0xff]
        %v905 = vld [vmem:[%s7 + $0x8] sm:$0xff]
        %v906 = vmul.f32 %v902, %v902
        %v907 = vsel %vm891, %v906, 0.0
        %908 = vadd.xlane.f32.xlu0 %v907
        %v909 = vpop.xlane.xlu0 %908
        %v910 = vmul.f32 %v904, %v904
        %v911 = vmul.f32 %v905, %v905
        %v912 = vsel %vm891, 1.0, 0
        %v915 = vsel %vm891, %v910, 0
        %v918 = vsel %vm891, %v911, 0
        %920 = vmatprep.subr.mxu0 0.0
        %921 = vmatpush1.xpose.msra.mxu0 %v915
        %922 = vmatprep.subr.mxu0 0.0
        %923 = vmatpush1.xpose.msra.mxu0 %v918
        %924 = vmatprep.subr.mxu0 0.0
        %925 = vmatpush1.xpose.msra.mxu0 0.0
        %926 = vmatprep.subr.mxu0 0.0
        %927 = vmatpush1.xpose.msra.mxu0 0.0
        %928 = vmatprep.subr.mxu0 0.0
        %929 = vmatpush1.xpose.msra.mxu0 0.0
        %930 = vmatprep.subr.mxu0 0.0
        %931 = vmatpush1.xpose.msra.mxu0 0.0
        %932 = vmatprep.subr.mxu0 0.0
        %933 = vmatpush1.xpose.msra.mxu0 0.0
        %934 = vmatprep.subr.mxu0 0.0
        %935 = vmatpush1.xpose.msra.mxu0 0.0
        %936 = vmatprep.subr.mxu0 0.0
        %937 = vmatpush1.xpose.msra.mxu0 0.0
        %938 = vmatprep.subr.mxu0 0.0
        %939 = vmatpush1.xpose.msra.mxu0 0.0
        %940 = vmatprep.subr.mxu0 0.0
        %941 = vmatpush1.xpose.msra.mxu0 0.0
        %942 = vmatprep.subr.mxu0 0.0
        %943 = vmatpush1.xpose.msra.mxu0 0.0
        %944 = vmatprep.subr.mxu0 0.0
        %945 = vmatpush1.xpose.msra.mxu0 0.0
        %946 = vmatprep.subr.mxu0 0.0
        %947 = vmatpush1.xpose.msra.mxu0 0.0
        %948 = vmatprep.subr.mxu0 0.0
        %949 = vmatpush1.xpose.msra.mxu0 0.0
        %950 = vmatprep.subr.mxu0 0.0
        %951 = vmatpush1.xpose.msra.mxu0 0.0
        %952 = vmatprep.subr.mxu0 0.0
        %953 = vmatpush1.xpose.msra.mxu0 0.0
        %954 = vmatprep.subr.mxu0 0.0
        %955 = vmatpush1.xpose.msra.mxu0 0.0
        %956 = vmatprep.subr.mxu0 0.0
        %957 = vmatpush1.xpose.msra.mxu0 0.0
        %958 = vmatprep.subr.mxu0 0.0
        %959 = vmatpush1.xpose.msra.mxu0 0.0
        %960 = vmatprep.subr.mxu0 0.0
        %961 = vmatpush1.xpose.msra.mxu0 0.0
        %962 = vmatprep.subr.mxu0 0.0
        %963 = vmatpush1.xpose.msra.mxu0 0.0
        %964 = vmatprep.subr.mxu0 0.0
        %965 = vmatpush1.xpose.msra.mxu0 0.0
        %966 = vmatprep.subr.mxu0 0.0
        %967 = vmatpush1.xpose.msra.mxu0 0.0
        %968 = vmatprep.subr.mxu0 0.0
        %969 = vmatpush1.xpose.msra.mxu0 0.0
        %970 = vmatprep.subr.mxu0 0.0
        %971 = vmatpush1.xpose.msra.mxu0 0.0
        %972 = vmatprep.subr.mxu0 0.0
        %973 = vmatpush1.xpose.msra.mxu0 0.0
        %974 = vmatprep.subr.mxu0 0.0
        %975 = vmatpush1.xpose.msra.mxu0 0.0
        %976 = vmatprep.subr.mxu0 0.0
        %977 = vmatpush1.xpose.msra.mxu0 0.0
        %978 = vmatprep.subr.mxu0 0.0
        %979 = vmatpush1.xpose.msra.mxu0 0.0
        %980 = vmatprep.subr.mxu0 0.0
        %981 = vmatpush1.xpose.msra.mxu0 0.0
        %982 = vmatprep.subr.mxu0 0.0
        %983 = vmatpush1.xpose.msra.mxu0 0.0
        %984 = vmatprep.mubr.f32.mxu0 0.0
        %985 = vmatmul.mubr.f32.gmra.mrb[0].mxu0 %v912
        %v986 = vpop.f32.mrb[0].mxu0
        %v987 = vadd.f32 0.0, %v986
        %v988 = vpop.f32.mrb[0].mxu0
        %989 = vdwg.mxu0
        %v991 = vsel %vm891, %v902, 0
        %v994 = vsel %vm891, %v904, 0
        %v997 = vsel %vm891, %v905, 0
        %999 = vmatprep.subr.mxu0 0.0
        %1000 = vmatpush1.xpose.msra.mxu0 %v994
        %1001 = vmatprep.subr.mxu0 0.0
        %1002 = vmatpush1.xpose.msra.mxu0 %v997
        %1003 = vmatprep.subr.mxu0 0.0
        %1004 = vmatpush1.xpose.msra.mxu0 0.0
        %1005 = vmatprep.subr.mxu0 0.0
        %1006 = vmatpush1.xpose.msra.mxu0 0.0
        %1007 = vmatprep.subr.mxu0 0.0
        %1008 = vmatpush1.xpose.msra.mxu0 0.0
        %1009 = vmatprep.subr.mxu0 0.0
        %1010 = vmatpush1.xpose.msra.mxu0 0.0
        %1011 = vmatprep.subr.mxu0 0.0
        %1012 = vmatpush1.xpose.msra.mxu0 0.0
        %1013 = vmatprep.subr.mxu0 0.0
        %1014 = vmatpush1.xpose.msra.mxu0 0.0
        %1015 = vmatprep.subr.mxu0 0.0
        %1016 = vmatpush1.xpose.msra.mxu0 0.0
        %1017 = vmatprep.subr.mxu0 0.0
        %1018 = vmatpush1.xpose.msra.mxu0 0.0
        %1019 = vmatprep.subr.mxu0 0.0
        %1020 = vmatpush1.xpose.msra.mxu0 0.0
        %1021 = vmatprep.subr.mxu0 0.0
        %1022 = vmatpush1.xpose.msra.mxu0 0.0
        %1023 = vmatprep.subr.mxu0 0.0
        %1024 = vmatpush1.xpose.msra.mxu0 0.0
        %1025 = vmatprep.subr.mxu0 0.0
        %1026 = vmatpush1.xpose.msra.mxu0 0.0
        %1027 = vmatprep.subr.mxu0 0.0
        %1028 = vmatpush1.xpose.msra.mxu0 0.0
        %1029 = vmatprep.subr.mxu0 0.0
        %1030 = vmatpush1.xpose.msra.mxu0 0.0
        %1031 = vmatprep.subr.mxu0 0.0
        %1032 = vmatpush1.xpose.msra.mxu0 0.0
        %1033 = vmatprep.subr.mxu0 0.0
        %1034 = vmatpush1.xpose.msra.mxu0 0.0
        %1035 = vmatprep.subr.mxu0 0.0
        %1036 = vmatpush1.xpose.msra.mxu0 0.0
        %1037 = vmatprep.subr.mxu0 0.0
        %1038 = vmatpush1.xpose.msra.mxu0 0.0
        %1039 = vmatprep.subr.mxu0 0.0
        %1040 = vmatpush1.xpose.msra.mxu0 0.0
        %1041 = vmatprep.subr.mxu0 0.0
        %1042 = vmatpush1.xpose.msra.mxu0 0.0
        %1043 = vmatprep.subr.mxu0 0.0
        %1044 = vmatpush1.xpose.msra.mxu0 0.0
        %1045 = vmatprep.subr.mxu0 0.0
        %1046 = vmatpush1.xpose.msra.mxu0 0.0
        %1047 = vmatprep.subr.mxu0 0.0
        %1048 = vmatpush1.xpose.msra.mxu0 0.0
        %1049 = vmatprep.subr.mxu0 0.0
        %1050 = vmatpush1.xpose.msra.mxu0 0.0
        %1051 = vmatprep.subr.mxu0 0.0
        %1052 = vmatpush1.xpose.msra.mxu0 0.0
        %1053 = vmatprep.subr.mxu0 0.0
        %1054 = vmatpush1.xpose.msra.mxu0 0.0
        %1055 = vmatprep.subr.mxu0 0.0
        %1056 = vmatpush1.xpose.msra.mxu0 0.0
        %1057 = vmatprep.subr.mxu0 0.0
        %1058 = vmatpush1.xpose.msra.mxu0 0.0
        %1059 = vmatprep.subr.mxu0 0.0
        %1060 = vmatpush1.xpose.msra.mxu0 0.0
        %1061 = vmatprep.subr.mxu0 0.0
        %1062 = vmatpush1.xpose.msra.mxu0 0.0
        %1063 = vmatprep.mubr.f32.mxu0 0.0
        %1064 = vmatmul.mubr.f32.gmra.mrb[0].mxu0 %v991
        %v1065 = vpop.f32.mrb[0].mxu0
        %v1066 = vadd.f32 0.0, %v1065
        %v1067 = vpop.f32.mrb[0].mxu0
        %1068 = vdwg.mxu0
        %v1069 = vlaneseq
        %v1070 = vshrl.u32 %v1069, 7
        %v1071 = vsub.s32 0, %v1070
        %v1072 = vrot.slane %v987, %v1071
        %v1073 = vadd.f32 %v909, %v1072
        %v1074 = vmul.f32 %v1066, 2.0
        %v1075 = vsub.f32 %v1073, %v1074
        %v1076 = vsel %vm891, %v1075, inf
        %1077 = vmin.xlane.f32.xlu0 %v1076
        %v1078 = vpop.xlane.xlu0 %1077
        %v1079 = vlaneseq
        %v1080 = vand.u32 %v1079, 127
        %vm1081 = vcmp.le.f32.partialorder %v1075, %v1078
        %v1082 = vsel %vm1081, %v1080, 16
        %v1083 = vsel %vm891, %v1082, 2147483647
        %v1084 = vand.u32 %v1083, 65535
        %v1085 = vshra.s32 %v1083, 16
        %v1086 = vcvt.s32.f32 %v1084
        %v1087 = vcvt.s32.f32 %v1085
        %1088 = vmin.xlane.f32.xlu0 %v1087
        %v1089 = vpop.xlane.xlu0 %1088
        %vm1090 = vcmp.eq.f32.partialorder %v1087, %v1089
        %v1091 = vsel %vm1090, %v1086, inf
        %1092 = vmin.xlane.f32.xlu0 %v1091
        %v1093 = vpop.xlane.xlu0 %1092
        %v1094 = vcvt.f32.s32 %v1093
        %v1095 = vcvt.f32.s32 %v1089
        %v1096 = vshll.u32 %v1095, 16
        %v1097 = vadd.s32 %v1096, %v1094
        %vm1098 = vcmp.eq.s32.totalorder %v1080, %v1097
        %v1099 = vsel %vm1098, 1, 0
        %v1100 = vcvt.s32.f32 %v1099
        %v1102 = vsel %vm891, %v1100, 0
        %1104 = vmatprep.subr.mxu0 0.0
        %1105 = vmatpush1.msra.mxu0 %v904
        %1106 = vmatprep.subr.mxu0 0.0
        %1107 = vmatpush1.msra.mxu0 %v905
        %1108 = vmatprep.subr.mxu0 0.0
        %1109 = vmatpush1.msra.mxu0 0.0
        %1110 = vmatprep.subr.mxu0 0.0
        %1111 = vmatpush1.msra.mxu0 0.0
        %1112 = vmatprep.subr.mxu0 0.0
        %1113 = vmatpush1.msra.mxu0 0.0
        %1114 = vmatprep.subr.mxu0 0.0
        %1115 = vmatpush1.msra.mxu0 0.0
        %1116 = vmatprep.subr.mxu0 0.0
        %1117 = vmatpush1.msra.mxu0 0.0
        %1118 = vmatprep.subr.mxu0 0.0
        %1119 = vmatpush1.msra.mxu0 0.0
        %1120 = vmatprep.subr.mxu0 0.0
        %1121 = vmatpush1.msra.mxu0 0.0
        %1122 = vmatprep.subr.mxu0 0.0
        %1123 = vmatpush1.msra.mxu0 0.0
        %1124 = vmatprep.subr.mxu0 0.0
        %1125 = vmatpush1.msra.mxu0 0.0
        %1126 = vmatprep.subr.mxu0 0.0
        %1127 = vmatpush1.msra.mxu0 0.0
        %1128 = vmatprep.subr.mxu0 0.0
        %1129 = vmatpush1.msra.mxu0 0.0
        %1130 = vmatprep.subr.mxu0 0.0
        %1131 = vmatpush1.msra.mxu0 0.0
        %1132 = vmatprep.subr.mxu0 0.0
        %1133 = vmatpush1.msra.mxu0 0.0
        %1134 = vmatprep.subr.mxu0 0.0
        %1135 = vmatpush1.msra.mxu0 0.0
        %1136 = vmatprep.subr.mxu0 0.0
        %1137 = vmatpush1.msra.mxu0 0.0
        %1138 = vmatprep.subr.mxu0 0.0
        %1139 = vmatpush1.msra.mxu0 0.0
        %1140 = vmatprep.subr.mxu0 0.0
        %1141 = vmatpush1.msra.mxu0 0.0
        %1142 = vmatprep.subr.mxu0 0.0
        %1143 = vmatpush1.msra.mxu0 0.0
        %1144 = vmatprep.subr.mxu0 0.0
        %1145 = vmatpush1.msra.mxu0 0.0
        %1146 = vmatprep.subr.mxu0 0.0
        %1147 = vmatpush1.msra.mxu0 0.0
        %1148 = vmatprep.subr.mxu0 0.0
        %1149 = vmatpush1.msra.mxu0 0.0
        %1150 = vmatprep.subr.mxu0 0.0
        %1151 = vmatpush1.msra.mxu0 0.0
        %1152 = vmatprep.subr.mxu0 0.0
        %1153 = vmatpush1.msra.mxu0 0.0
        %1154 = vmatprep.subr.mxu0 0.0
        %1155 = vmatpush1.msra.mxu0 0.0
        %1156 = vmatprep.subr.mxu0 0.0
        %1157 = vmatpush1.msra.mxu0 0.0
        %1158 = vmatprep.subr.mxu0 0.0
        %1159 = vmatpush1.msra.mxu0 0.0
        %1160 = vmatprep.subr.mxu0 0.0
        %1161 = vmatpush1.msra.mxu0 0.0
        %1162 = vmatprep.subr.mxu0 0.0
        %1163 = vmatpush1.msra.mxu0 0.0
        %1164 = vmatprep.subr.mxu0 0.0
        %1165 = vmatpush1.msra.mxu0 0.0
        %1166 = vmatprep.subr.mxu0 0.0
        %1167 = vmatpush1.msra.mxu0 0.0
        %1168 = vmatprep.mubr.f32.mxu0 0.0
        %1169 = vmatmul.mubr.f32.gmra.mrb[0].mxu0 %v1102
        %v1170 = vpop.f32.mrb[0].mxu0
        %v1171 = vadd.f32 0.0, %v1170
        %v1172 = vpop.f32.mrb[0].mxu0
        %1173 = vdwg.mxu0
        %v1174 = vsub.f32 %v1171, %v902
        %v1175 = vmul.f32 %v1174, %v1174
        %v1176 = vsel %vm891, %v1175, 0.0
        %1177 = vadd.xlane.f32.xlu0 %v1176
        %v1178 = vpop.xlane.xlu0 %1177
        %v1179 = vrot.slane %v1178, 4
        %v1180 = vadd.f32 %v1178, %v1179
        %v1181 = vrot.slane %v1180, 2
        %v1182 = vadd.f32 %v1180, %v1181
        %v1183 = vrot.slane %v1182, 1
        %v1184 = vadd.f32 %v1182, %v1183
        %s1185 = vtos %v1184
        %v1186 = vstv %s1185
        %v1187 = vrcp.pop 128.0
        %v1188 = vmul.f32 %v1186, %v1187
        %v1189 = vmul.f32 %v1188, 1.25
        %v1190 = vpack.c.bf16 %v1171, %v1171
        %v1191 = vld [vmem:[%s8] sm:$0xff]
        %v1192 = vld [vmem:[%s8 + $0x8] sm:$0xff]
        %v1195 = vunpack.c.l.b16 %v1191
        %v1196 = vunpack.c.h.b16 %v1191
        %v1197 = vunpack.c.l.b16 %v1192
        %v1198 = vunpack.c.h.b16 %v1192
        %v1199 = vpack.c.b16 %v1197, %v1195
        %v1200 = vpack.c.b16 %v1198, %v1196
        %v1204 = vsel %vm891, %v1190, 0
        %1206 = vmatprep.subr.bf16.mxu0 %v1200
        %1207 = vmatpush1.bf16.msra.mxu0 %v1199
        %1208 = vmatprep.subr.bf16.mxu0 0
        %1209 = vmatpush1.bf16.msra.mxu0 0
        %1210 = vmatprep.subr.bf16.mxu0 0
        %1211 = vmatpush1.bf16.msra.mxu0 0
        %1212 = vmatprep.subr.bf16.mxu0 0
        %1213 = vmatpush1.bf16.msra.mxu0 0
        %1214 = vmatprep.subr.bf16.mxu0 0
        %1215 = vmatpush1.bf16.msra.mxu0 0
        %1216 = vmatprep.subr.bf16.mxu0 0
        %1217 = vmatpush1.bf16.msra.mxu0 0
        %1218 = vmatprep.subr.bf16.mxu0 0
        %1219 = vmatpush1.bf16.msra.mxu0 0
        %1220 = vmatprep.subr.bf16.mxu0 0
        %1221 = vmatpush1.bf16.msra.mxu0 0
        %1222 = vmatprep.subr.bf16.mxu0 0
        %1223 = vmatpush1.bf16.msra.mxu0 0
        %1224 = vmatprep.subr.bf16.mxu0 0
        %1225 = vmatpush1.bf16.msra.mxu0 0
        %1226 = vmatprep.subr.bf16.mxu0 0
        %1227 = vmatpush1.bf16.msra.mxu0 0
        %1228 = vmatprep.subr.bf16.mxu0 0
        %1229 = vmatpush1.bf16.msra.mxu0 0
        %1230 = vmatprep.subr.bf16.mxu0 0
        %1231 = vmatpush1.bf16.msra.mxu0 0
        %1232 = vmatprep.subr.bf16.mxu0 0
        %1233 = vmatpush1.bf16.msra.mxu0 0
        %1234 = vmatprep.subr.bf16.mxu0 0
        %1235 = vmatpush1.bf16.msra.mxu0 0
        %1236 = vmatprep.subr.bf16.mxu0 0
        %1237 = vmatpush1.bf16.msra.mxu0 0
        %1238 = vmatprep.mubr.bf16.mxu0 0
        %1239 = vmatmul.mubr.bf16.gmra.mrb[0].mxu0 %v1204
        %v1240 = vpop.f32.mrb[0].mxu0
        %v1241 = vadd.f32 0.0, %v1240
        %v1242 = vpop.f32.mrb[0].mxu0
        %v1243 = vadd.f32 0.0, %v1242
        %v1244 = vpop.f32.mrb[0].mxu0
        %v1245 = vpop.f32.mrb[0].mxu0
        %1246 = vdwg.mxu0
        %1247 = vmatprep.subr.mxu0 %v1243
        %1248 = vmatpush1.msra.mxu0 %v1241
        %1249 = vmatprep.subr.mxu0 0.0
        %1250 = vmatpush1.msra.mxu0 0.0
        %1251 = vmatprep.subr.mxu0 0.0
        %1252 = vmatpush1.msra.mxu0 0.0
        %1253 = vmatprep.subr.mxu0 0.0
        %1254 = vmatpush1.msra.mxu0 0.0
        %1255 = vmatprep.subr.mxu0 0.0
        %1256 = vmatpush1.msra.mxu0 0.0
        %1257 = vmatprep.subr.mxu0 0.0
        %1258 = vmatpush1.msra.mxu0 0.0
        %1259 = vmatprep.subr.mxu0 0.0
        %1260 = vmatpush1.msra.mxu0 0.0
        %1261 = vmatprep.subr.mxu0 0.0
        %1262 = vmatpush1.msra.mxu0 0.0
        %1263 = vmatprep.subr.mxu0 0.0
        %1264 = vmatpush1.msra.mxu0 0.0
        %1265 = vmatprep.subr.mxu0 0.0
        %1266 = vmatpush1.msra.mxu0 0.0
        %1267 = vmatprep.subr.mxu0 0.0
        %1268 = vmatpush1.msra.mxu0 0.0
        %1269 = vmatprep.subr.mxu0 0.0
        %1270 = vmatpush1.msra.mxu0 0.0
        %1271 = vmatprep.subr.mxu0 0.0
        %1272 = vmatpush1.msra.mxu0 0.0
        %1273 = vmatprep.subr.mxu0 0.0
        %1274 = vmatpush1.msra.mxu0 0.0
        %1275 = vmatprep.subr.mxu0 0.0
        %1276 = vmatpush1.msra.mxu0 0.0
        %1277 = vmatprep.subr.mxu0 0.0
        %1278 = vmatpush1.msra.mxu0 0.0
        %1279 = vmatprep.subr.mxu0 0.0
        %1280 = vmatpush1.msra.mxu0 0.0
        %1281 = vmatprep.subr.mxu0 0.0
        %1282 = vmatpush1.msra.mxu0 0.0
        %1283 = vmatprep.subr.mxu0 0.0
        %1284 = vmatpush1.msra.mxu0 0.0
        %1285 = vmatprep.subr.mxu0 0.0
        %1286 = vmatpush1.msra.mxu0 0.0
        %1287 = vmatprep.subr.mxu0 0.0
        %1288 = vmatpush1.msra.mxu0 0.0
        %1289 = vmatprep.subr.mxu0 0.0
        %1290 = vmatpush1.msra.mxu0 0.0
        %1291 = vmatprep.subr.mxu0 0.0
        %1292 = vmatpush1.msra.mxu0 0.0
        %1293 = vmatprep.subr.mxu0 0.0
        %1294 = vmatpush1.msra.mxu0 0.0
        %1295 = vmatprep.subr.mxu0 0.0
        %1296 = vmatpush1.msra.mxu0 0.0
        %1297 = vmatprep.subr.mxu0 0.0
        %1298 = vmatpush1.msra.mxu0 0.0
        %1299 = vmatprep.subr.mxu0 0.0
        %1300 = vmatpush1.msra.mxu0 0.0
        %1301 = vmatprep.subr.mxu0 0.0
        %1302 = vmatpush1.msra.mxu0 0.0
        %1303 = vmatprep.subr.mxu0 0.0
        %1304 = vmatpush1.msra.mxu0 0.0
        %1305 = vmatprep.subr.mxu0 0.0
        %1306 = vmatpush1.msra.mxu0 0.0
        %1307 = vmatprep.subr.mxu0 0.0
        %1308 = vmatpush1.msra.mxu0 0.0
        %1309 = vmatprep.subr.mxu0 0.0
        %1310 = vmatpush1.msra.mxu0 0.0
        %1311 = vmatprep.mubr.f32.mxu0 0.0
        %1312 = vmatmul.mubr.f32.gmra.mrb[0].mxu0 %v734
        %v1313 = vpop.f32.mrb[0].mxu0
        %v1314 = vadd.f32 0.0, %v1313
        %v1315 = vpop.f32.mrb[0].mxu0
        %v1316 = vadd.f32 0.0, %v1315
        %1317 = vdwg.mxu0
        %v1318 = vmul.f32 %v1314, 0.125
        %v1319 = vmul.f32 %v1316, 0.125
        %v1320 = vlaneseq
        %v1321 = vshrl.u32 %v1320, 7
        %v1322 = vsub.s32 0, %v1321
        %v1323 = vrot.slane %v1318, %v1322
        %v1324 = vlaneseq
        %v1325 = vshrl.u32 %v1324, 7
        %v1326 = vsub.s32 0, %v1325
        %v1327 = vrot.slane %v1319, %v1326
        %v1328 = vsub.f32 %v1241, %v1323
        %v1329 = vsub.f32 %v1243, %v1327
        %v1330 = vmul.f32 %v1328, %v1328
        %v1331 = vmul.f32 %v1329, %v1329
        %1332 = vmatprep.subr.mxu0 %v1331
        %1333 = vmatpush1.msra.mxu0 %v1330
        %1334 = vmatprep.subr.mxu0 0.0
        %1335 = vmatpush1.msra.mxu0 0.0
        %1336 = vmatprep.subr.mxu0 0.0
        %1337 = vmatpush1.msra.mxu0 0.0
        %1338 = vmatprep.subr.mxu0 0.0
        %1339 = vmatpush1.msra.mxu0 0.0
        %1340 = vmatprep.subr.mxu0 0.0
        %1341 = vmatpush1.msra.mxu0 0.0
        %1342 = vmatprep.subr.mxu0 0.0
        %1343 = vmatpush1.msra.mxu0 0.0
        %1344 = vmatprep.subr.mxu0 0.0
        %1345 = vmatpush1.msra.mxu0 0.0
        %1346 = vmatprep.subr.mxu0 0.0
        %1347 = vmatpush1.msra.mxu0 0.0
        %1348 = vmatprep.subr.mxu0 0.0
        %1349 = vmatpush1.msra.mxu0 0.0
        %1350 = vmatprep.subr.mxu0 0.0
        %1351 = vmatpush1.msra.mxu0 0.0
        %1352 = vmatprep.subr.mxu0 0.0
        %1353 = vmatpush1.msra.mxu0 0.0
        %1354 = vmatprep.subr.mxu0 0.0
        %1355 = vmatpush1.msra.mxu0 0.0
        %1356 = vmatprep.subr.mxu0 0.0
        %1357 = vmatpush1.msra.mxu0 0.0
        %1358 = vmatprep.subr.mxu0 0.0
        %1359 = vmatpush1.msra.mxu0 0.0
        %1360 = vmatprep.subr.mxu0 0.0
        %1361 = vmatpush1.msra.mxu0 0.0
        %1362 = vmatprep.subr.mxu0 0.0
        %1363 = vmatpush1.msra.mxu0 0.0
        %1364 = vmatprep.subr.mxu0 0.0
        %1365 = vmatpush1.msra.mxu0 0.0
        %1366 = vmatprep.subr.mxu0 0.0
        %1367 = vmatpush1.msra.mxu0 0.0
        %1368 = vmatprep.subr.mxu0 0.0
        %1369 = vmatpush1.msra.mxu0 0.0
        %1370 = vmatprep.subr.mxu0 0.0
        %1371 = vmatpush1.msra.mxu0 0.0
        %1372 = vmatprep.subr.mxu0 0.0
        %1373 = vmatpush1.msra.mxu0 0.0
        %1374 = vmatprep.subr.mxu0 0.0
        %1375 = vmatpush1.msra.mxu0 0.0
        %1376 = vmatprep.subr.mxu0 0.0
        %1377 = vmatpush1.msra.mxu0 0.0
        %1378 = vmatprep.subr.mxu0 0.0
        %1379 = vmatpush1.msra.mxu0 0.0
        %1380 = vmatprep.subr.mxu0 0.0
        %1381 = vmatpush1.msra.mxu0 0.0
        %1382 = vmatprep.subr.mxu0 0.0
        %1383 = vmatpush1.msra.mxu0 0.0
        %1384 = vmatprep.subr.mxu0 0.0
        %1385 = vmatpush1.msra.mxu0 0.0
        %1386 = vmatprep.subr.mxu0 0.0
        %1387 = vmatpush1.msra.mxu0 0.0
        %1388 = vmatprep.subr.mxu0 0.0
        %1389 = vmatpush1.msra.mxu0 0.0
        %1390 = vmatprep.subr.mxu0 0.0
        %1391 = vmatpush1.msra.mxu0 0.0
        %1392 = vmatprep.subr.mxu0 0.0
        %1393 = vmatpush1.msra.mxu0 0.0
        %1394 = vmatprep.subr.mxu0 0.0
        %1395 = vmatpush1.msra.mxu0 0.0
        %1396 = vmatprep.mubr.f32.mxu0 0.0
        %1397 = vmatmul.mubr.f32.gmra.mrb[0].mxu0 %v734
        %v1398 = vpop.f32.mrb[0].mxu0
        %v1399 = vadd.f32 0.0, %v1398
        %v1400 = vpop.f32.mrb[0].mxu0
        %v1401 = vadd.f32 0.0, %v1400
        %1402 = vdwg.mxu0
        %v1403 = vmul.f32 %v1399, 0.125
        %v1404 = vmul.f32 %v1401, 0.125
        %v1405 = vadd.f32 %v1403, 1e-05
        %v1406 = vadd.f32 %v1404, 1e-05
        %v1407 = vrsqrt.pop %v1405
        %v1408 = vrsqrt.pop %v1406
        %v1409 = vlaneseq
        %v1410 = vshrl.u32 %v1409, 7
        %v1411 = vsub.s32 0, %v1410
        %v1412 = vrot.slane %v1407, %v1411
        %v1413 = vlaneseq
        %v1414 = vshrl.u32 %v1413, 7
        %v1415 = vsub.s32 0, %v1414
        %v1416 = vrot.slane %v1408, %v1415
        %v1417 = vmul.f32 %v1328, %v1412
        %v1418 = vmul.f32 %v1329, %v1416
        %v1419 = vmax.f32 %v1417, %v1418
        %1420 = vmax.xlane.f32.xlu0 %v1419
        %v1421 = vpop.xlane.xlu0 %1420
        %v1422 = vsub.f32 %v1417, %v1421
        %v1423 = vsub.f32 %v1418, %v1421
        %v1424 = vmul.f32 %v1422, 1.442695
        %v1425 = vpow.pop %v1424
        %v1426 = vmul.f32 %v1423, 1.442695
        %v1427 = vpow.pop %v1426
        %v1428 = vadd.f32 %v1425, %v1427
        %1429 = vadd.xlane.f32.xlu0 %v1428
        %v1430 = vpop.xlane.xlu0 %1429
        %v1431 = vlog2.pop %v1430
        %v1432 = vmul.f32 %v1431, 0.6931472
        %v1433 = vadd.f32 %v1421, %v1432
        %v1434 = vsub.f32 %v1417, %v1433
        %v1435 = vsub.f32 %v1418, %v1433
        %v1436 = vsub.f32 0.0, %v368
        %v1437 = vsub.f32 0.0, %v369
        %v1438 = vmul.f32 %v1436, %v1434
        %v1439 = vmul.f32 %v1437, %v1435
        %v1440 = vadd.f32 %v1438, %v1439
        %1441 = vadd.xlane.f32.xlu0 %v1440
        %v1442 = vpop.xlane.xlu0 %1441
        %v1443 = vrot.slane %v1442, 4
        %v1444 = vadd.f32 %v1442, %v1443
        %v1445 = vrot.slane %v1444, 2
        %v1446 = vadd.f32 %v1444, %v1445
        %v1447 = vrot.slane %v1446, 1
        %v1448 = vadd.f32 %v1446, %v1447
        %v1449 = vrcp.pop 8.0
        %v1450 = vmul.f32 %v1448, %v1449
        %v1451 = vadd.f32 %v1450, %v1189
        %vm1452 = vcmask 0
        %1453 = vst.msk [vmem:[%s366] sm:$0x1] %vm1452, %v1451
        %s1454 = sand.u32 %s227, 1
        %s1455 = scalar_lea.sflag [#allocation3], %s1454
        %s1456 = sand.u32 %s227, 1
        %s1457 = smul.addr %s1456, 8
        %s1458 = scalar_lea.vmem [#allocation2], %s1457
        %p1459 = scmp.lt.s32.totalorder %s25, 3
        %s1460 = scalar_select %p1459, %s25, 3
        %s1461 = scalar_lea.vmem %s10, %s1460
        // Predicated region
        $region57: #{tpu_custom_call.1} parent=55 // pred_check
          %p1462 = pneg %p237
        $region58: #{tpu_custom_call.1} parent=55 // pred_check_branch
          %1464 = sbr.rel (%p1462) target = $region60
        $region59: #{tpu_custom_call.1} parent=55 // pred_region
          %s1466 = ssub.s32 128, 128
          %1467 = vsyncadd %s1455, %s1466
          %s1468 = smul.addr %s25, 128
          %s1469 = scalar_lea.hbm %s9, %s1468
          %s1471 = sshll.u32 %s1458, 4
          %s1472 = int_to_ptr.vmem [resolvable:$true] %s1471
          %1474 = dma.vmem_to_hbm [thread:$0]  %s1472, 128, %s1469, %s1455
        $region60: #{tpu_custom_call.1} parent=55 // pred_fallthru
          _
        // Predicated region
        $region61: #{tpu_custom_call.1} parent=55 // pred_check
          %p1475 = pneg %p263
        $region62: #{tpu_custom_call.1} parent=55 // pred_check_branch
          %1477 = sbr.rel (%p1475) target = $region64
        $region63: #{tpu_custom_call.1} parent=55 // pred_region
          _
        $region64: #{tpu_custom_call.1} parent=55 // pred_fallthru
          _
      $region56: #{tpu_custom_call.1} parent=5 // pred_fallthru
        _
      %p1478 = scmp.le.s32.totalorder 2, %s20
      // Predicated region
      $region65: #{tpu_custom_call.1} parent=5 // pred_check
        %p1479 = pneg %p1478
      $region66: #{tpu_custom_call.1} parent=5 // pred_check_branch
        %1481 = sbr.rel (%p1479) target = $region68
      $region67: #{tpu_custom_call.1} parent=5 // pred_region
        %s1482 = ssub.s32 %s20, 2
        // Predicated region
        $region69: #{tpu_custom_call.1} parent=67 // pred_check
          %p1483 = pneg %p243
        $region70: #{tpu_custom_call.1} parent=67 // pred_check_branch
          %1485 = sbr.rel (%p1483) target = $region72
        $region71: #{tpu_custom_call.1} parent=67 // pred_region
          %s1486 = sand.u32 %s228, 1
          %s1487 = scalar_lea.sflag [#allocation3], %s1486
          %s1488 = sand.u32 %s228, 1
          %s1489 = smul.addr %s1488, 8
          %s1490 = scalar_lea.vmem [#allocation2], %s1489
          %1491 = dma.done %s1487, 128
        $region72: #{tpu_custom_call.1} parent=67 // pred_fallthru
          _
        // Predicated region
        $region73: #{tpu_custom_call.1} parent=67 // pred_check
          %p1492 = pneg %p269
        $region74: #{tpu_custom_call.1} parent=67 // pred_check_branch
          %1494 = sbr.rel (%p1492) target = $region76
        $region75: #{tpu_custom_call.1} parent=67 // pred_region
          %p1495 = scmp.lt.s32.totalorder %s26, 3
          %s1496 = scalar_select %p1495, %s26, 3
          %s1497 = scalar_lea.vmem %s10, %s1496
        $region76: #{tpu_custom_call.1} parent=67 // pred_fallthru
          _
      $region68: #{tpu_custom_call.1} parent=5 // pred_fallthru
        _
    $region6: #{tpu_custom_call.1} parent=1 // loop_footer
      %s24 = sadd.s32 1, %s20
    $region7: #{tpu_custom_call.1} parent=1 // loop_footer_branch
      %19 = sbr.rel target = $region3
    $region8: #{tpu_custom_call.1} parent=1 // loop_exit
      _
    %1498 = vsyncpa [#allocation3], 1
    %s1499 = scalar_lea.sflag [#allocation3], 1
    %1500 = vsyncpa %s1499, 1

</llo_original>
